<compile_context>
chip_gen: v6e
topology: v6e:2x2x1
jax: 0.10.0
libtpu: 0.0.40
codegen_flags: <defaults>
</compile_context>

<pallas_src>
import math

import jax
import jax.numpy as jnp
from jax import lax
from jax.experimental import pallas as pl
from jax.experimental.pallas import tpu as pltpu

# ---------------- hyper-parameters (model_dim == hidden_dim, as the residual
# connections in EncoderLayer require) ----------------------------------------
B = 2            # batch
S = 8            # sequence length
H = 32           # model_dim == hidden_dim
NH = 4           # num_heads
HD = H // NH     # head_dim = 8
EPS = 1e-5       # nn.LayerNorm default eps
R = B * S        # flattened rows = 16


# ------------------------------ kernel ----------------------------------------
def _layer_norm(x, g, b):
    mu = jnp.mean(x, axis=-1, keepdims=True)
    var = jnp.mean((x - mu) ** 2, axis=-1, keepdims=True)
    return (x - mu) * lax.rsqrt(var + EPS) * g + b


def encoder_layer_kernel(x_ref, bmask_ref, wslab_ref, bqkv_ref, vec_ref, out_ref):
    x = x_ref[...]                            # (R, H)
    bmask = bmask_ref[...]                    # (R, R) block-diagonal 0 / -1e30

    w = wslab_ref[...]                        # (H, 6H) packed weight slab
    wqkv = w[:, 0:3 * H]                      # (H, 3H)  (Q cols pre-scaled)
    wo = w[:, 3 * H:4 * H]                    # (H, H)
    fc1w = w[:, 4 * H:5 * H]                  # (H, H)
    fc2w = w[:, 5 * H:6 * H]                  # (H, H)

    vec = vec_ref[...]                        # (8, H) stacked bias/LN vectors
    bo, fc1b, fc2b = vec[0:1, :], vec[1:2, :], vec[2:3, :]
    ln1g, ln1b = vec[3:4, :], vec[4:5, :]
    ln2g, ln2b = vec[5:6, :], vec[6:7, :]

    # fused Q|K|V projection (1/sqrt(HD) folded into Q weights + bias)
    qkv = jnp.dot(x, wqkv, preferred_element_type=jnp.float32) + bqkv_ref[...]

    # K transposed once; per-head scores use static sublane slices of k_t
    k_t = qkv[:, H:2 * H].T                   # (H, R)

    # multi-head attention: both batches share one matmul per head (bmask
    # kills cross-batch logits); heads accumulate straight through Wo blocks.
    attn = jnp.zeros((R, H), jnp.float32)
    for hh in range(NH):
        c0 = hh * HD
        q_h = qkv[:, c0:c0 + HD]                          # (R, HD), pre-scaled
        v_h = qkv[:, 2 * H + c0:2 * H + c0 + HD]          # (R, HD)
        s = jnp.dot(q_h, k_t[c0:c0 + HD, :],
                    preferred_element_type=jnp.float32)   # (R, R)
        s = s + bmask
        s = s - jnp.max(s, axis=-1, keepdims=True)
        p = jnp.exp(s)
        p = p * pl.reciprocal(jnp.sum(p, axis=-1, keepdims=True), approx=False)
        ctx = jnp.dot(p, v_h, preferred_element_type=jnp.float32)      # (R, HD)
        attn = attn + jnp.dot(ctx, wo[c0:c0 + HD, :],
                              preferred_element_type=jnp.float32)      # (R, H)
    attn = attn + bo                          # == Wo(combine_heads(...)) + bias

    # residual + layer norm 1   (dropout == identity in eval mode)
    x1 = _layer_norm(x + attn, ln1g, ln1b)

    # feed-forward applied to attn_output (exactly as EncoderLayer.forward does)
    ff = jnp.dot(attn, fc1w, preferred_element_type=jnp.float32) + fc1b
    ff = jnp.maximum(ff, 0.0)
    ff = jnp.dot(ff, fc2w, preferred_element_type=jnp.float32) + fc2b

    # residual + layer norm 2
    out_ref[...] = _layer_norm(x1 + ff, ln2g, ln2b)


# ------------------------------ parameters ------------------------------------
def init_params(key):
    """PyTorch-structured params; linear weights stored (in, out) so y = x@W+b."""
    p = {}

    def nk():
        nonlocal key
        key, sk = jax.random.split(key)
        return sk

    def xavier(k, shape):
        fin, fout = shape
        lim = math.sqrt(6.0 / (fin + fout))
        return jax.random.uniform(k, shape, jnp.float32, -lim, lim)

    for name in ('wq', 'wk', 'wv', 'wo', 'fc1w', 'fc2w'):
        p[name] = xavier(nk(), (H, H))
    for name in ('bq', 'bk', 'bv', 'bo', 'fc1b', 'fc2b'):
        p[name] = jax.random.uniform(nk(), (1, H), jnp.float32, -0.1, 0.1)
    p['ln1g'] = jnp.ones((1, H), jnp.float32)
    p['ln1b'] = jnp.zeros((1, H), jnp.float32)
    p['ln2g'] = jnp.ones((1, H), jnp.float32)
    p['ln2b'] = jnp.zeros((1, H), jnp.float32)
    return p, key


def fuse_params(p):
    """One-time packing into kernel-ready slabs (applies the DMA-count and
    scale-folding feedback)."""
    scale = 1.0 / math.sqrt(HD)
    wqkv = jnp.concatenate([p['wq'] * scale, p['wk'], p['wv']], axis=-1)  # (H,3H)
    bqkv = jnp.concatenate([p['bq'] * scale, p['bk'], p['bv']], axis=-1)  # (1,3H)
    wslab = jnp.concatenate([wqkv, p['wo'], p['fc1w'], p['fc2w']],
                            axis=-1)                                      # (H,6H)
    vecs = jnp.concatenate(
        [p['bo'], p['fc1b'], p['fc2b'],
         p['ln1g'], p['ln1b'], p['ln2g'], p['ln2b'],
         jnp.zeros((1, H), jnp.float32)], axis=0)                         # (8,H)
    # additive block-diagonal batch mask for the shared attention matmuls
    rb = jnp.arange(R) // S
    bmask = jnp.where(rb[:, None] == rb[None, :], 0.0, -1e30).astype(jnp.float32)
    return {'wslab': wslab, 'bqkv': bqkv, 'vecs': vecs, 'bmask': bmask}


# ------------------------------ wrapper ----------------------------------------
@jax.jit
def encoder_layer_forward(x, kp):
    """x: (B, S, H) float32 -> (B, S, H) float32."""
    xf = x.reshape(R, H)
    inputs = (xf, kp['bmask'], kp['wslab'], kp['bqkv'], kp['vecs'])
    out = pl.pallas_call(
        encoder_layer_kernel,
        out_shape=jax.ShapeDtypeStruct((R, H), jnp.float32),
        in_specs=[pl.BlockSpec(memory_space=pltpu.MemorySpace.VMEM)
                  for _ in inputs],
        out_specs=pl.BlockSpec(memory_space=pltpu.MemorySpace.VMEM),
    )(*inputs)
    return out.reshape(B, S, H)


# ------------------------------ reference (pure JAX) ----------------------------
def encoder_layer_reference(x, p):
    def ln(v, g, b):
        mu = v.mean(-1, keepdims=True)
        var = ((v - mu) ** 2).mean(-1, keepdims=True)
        return (v - mu) / jnp.sqrt(var + EPS) * g + b

    with jax.default_matmul_precision("highest"):
        q = x @ p['wq'] + p['bq']
        k = x @ p['wk'] + p['bk']
        v = x @ p['wv'] + p['bv']

        def split(t):
            return t.reshape(B, S, NH, HD).transpose(0, 2, 1, 3)

        Q, K, V = split(q), split(k), split(v)
        s = jnp.einsum('bhqd,bhkd->bhqk', Q, K) / math.sqrt(HD)
        a = jax.nn.softmax(s, axis=-1)
        ctx = jnp.einsum('bhqk,bhkd->bhqd', a, V)
        ctx = ctx.transpose(0, 2, 1, 3).reshape(B, S, H)
        attn = ctx @ p['wo'] + p['bo']

        x1 = ln(x + attn, p['ln1g'], p['ln1b'])
        ff = jnp.maximum(attn @ p['fc1w'] + p['fc1b'], 0.0) @ p['fc2w'] + p['fc2b']
        return ln(x1 + ff, p['ln2g'], p['ln2b'])


# ------------------------------ main --------------------------------------------
if __name__ == "__main__":
    key = jax.random.PRNGKey(0)
    params, key = init_params(key)
    kparams = fuse_params(params)

    key, sk = jax.random.split(key)
    x = jax.random.normal(sk, (B, S, H), jnp.float32)

    out = encoder_layer_forward(x, kparams)
    jax.block_until_ready(out)

    assert out.shape == (B, S, H), out.shape
    assert bool(jnp.all(jnp.isfinite(out)))

    ref = encoder_layer_reference(x, params)
    max_err = float(jnp.max(jnp.abs(out - ref)))
    assert bool(jnp.allclose(out, ref, rtol=2e-2, atol=2e-2)), max_err

    print("KERNEL_OK")
</pallas_src>

<mosaic_0001>
module attributes {stable_mosaic.version = 11 : i64} {
  func.func @encoder_layer_kernel(%arg0: memref<16x32xf32, #tpu.memory_space<vmem>>, %arg1: memref<16x16xf32, #tpu.memory_space<vmem>>, %arg2: memref<32x192xf32, #tpu.memory_space<vmem>>, %arg3: memref<1x96xf32, #tpu.memory_space<vmem>>, %arg4: memref<8x32xf32, #tpu.memory_space<vmem>>, %arg5: memref<16x32xf32, #tpu.memory_space<vmem>>) attributes {dimension_semantics = [], scalar_prefetch = 0 : i64, scratch_operands = 0 : i64, tpu.core_type = #tpu.core_type<tc>} {
    %c0 = arith.constant 0 : index
    %c0_0 = arith.constant 0 : index
    %0 = vector.load %arg0[%c0, %c0_0] : memref<16x32xf32, #tpu.memory_space<vmem>>, vector<16x32xf32>
    %c0_1 = arith.constant 0 : index
    %c0_2 = arith.constant 0 : index
    %1 = vector.load %arg1[%c0_1, %c0_2] : memref<16x16xf32, #tpu.memory_space<vmem>>, vector<16x16xf32>
    %c0_3 = arith.constant 0 : index
    %c0_4 = arith.constant 0 : index
    %2 = vector.load %arg2[%c0_3, %c0_4] : memref<32x192xf32, #tpu.memory_space<vmem>>, vector<32x192xf32>
    %3 = vector.extract_strided_slice %2 {offsets = [0, 0], sizes = [32, 96], strides = [1, 1]} : vector<32x192xf32> to vector<32x96xf32>
    %4 = vector.extract_strided_slice %2 {offsets = [0, 96], sizes = [32, 32], strides = [1, 1]} : vector<32x192xf32> to vector<32x32xf32>
    %5 = vector.extract_strided_slice %2 {offsets = [0, 128], sizes = [32, 32], strides = [1, 1]} : vector<32x192xf32> to vector<32x32xf32>
    %6 = vector.extract_strided_slice %2 {offsets = [0, 160], sizes = [32, 32], strides = [1, 1]} : vector<32x192xf32> to vector<32x32xf32>
    %c0_5 = arith.constant 0 : index
    %c0_6 = arith.constant 0 : index
    %7 = vector.load %arg4[%c0_5, %c0_6] : memref<8x32xf32, #tpu.memory_space<vmem>>, vector<8x32xf32>
    %8 = vector.extract_strided_slice %7 {offsets = [0, 0], sizes = [1, 32], strides = [1, 1]} : vector<8x32xf32> to vector<1x32xf32>
    %9 = vector.extract_strided_slice %7 {offsets = [1, 0], sizes = [1, 32], strides = [1, 1]} : vector<8x32xf32> to vector<1x32xf32>
    %10 = vector.extract_strided_slice %7 {offsets = [2, 0], sizes = [1, 32], strides = [1, 1]} : vector<8x32xf32> to vector<1x32xf32>
    %11 = vector.extract_strided_slice %7 {offsets = [3, 0], sizes = [1, 32], strides = [1, 1]} : vector<8x32xf32> to vector<1x32xf32>
    %12 = vector.extract_strided_slice %7 {offsets = [4, 0], sizes = [1, 32], strides = [1, 1]} : vector<8x32xf32> to vector<1x32xf32>
    %13 = vector.extract_strided_slice %7 {offsets = [5, 0], sizes = [1, 32], strides = [1, 1]} : vector<8x32xf32> to vector<1x32xf32>
    %14 = vector.extract_strided_slice %7 {offsets = [6, 0], sizes = [1, 32], strides = [1, 1]} : vector<8x32xf32> to vector<1x32xf32>
    %cst = arith.constant dense<0.000000e+00> : vector<16x96xf32>
    %15 = tpu.matmul %0, %3, %cst {dimension_numbers = #tpu.dot_dimension_numbers<[1], [0], [0], [1], [0, 0, 1, 1], [], []>} : vector<16x32xf32>, vector<32x96xf32>, vector<16x96xf32> -> vector<16x96xf32>
    %c0_7 = arith.constant 0 : index
    %c0_8 = arith.constant 0 : index
    %16 = vector.load %arg3[%c0_7, %c0_8] : memref<1x96xf32, #tpu.memory_space<vmem>>, vector<1x96xf32>
    %17 = vector.broadcast %16 : vector<1x96xf32> to vector<16x96xf32>
    %18 = arith.addf %15, %17 : vector<16x96xf32>
    %19 = vector.extract_strided_slice %18 {offsets = [0, 32], sizes = [16, 32], strides = [1, 1]} : vector<16x96xf32> to vector<16x32xf32>
    %20 = tpu.transpose %19, [1, 0] : vector<16x32xf32> -> vector<32x16xf32>
    %cst_9 = arith.constant 0.000000e+00 : f32
    %21 = vector.broadcast %cst_9 : f32 to vector<16x32xf32>
    %22 = vector.extract_strided_slice %18 {offsets = [0, 0], sizes = [16, 8], strides = [1, 1]} : vector<16x96xf32> to vector<16x8xf32>
    %23 = vector.extract_strided_slice %18 {offsets = [0, 64], sizes = [16, 8], strides = [1, 1]} : vector<16x96xf32> to vector<16x8xf32>
    %24 = vector.extract_strided_slice %20 {offsets = [0, 0], sizes = [8, 16], strides = [1, 1]} : vector<32x16xf32> to vector<8x16xf32>
    %cst_10 = arith.constant dense<0.000000e+00> : vector<16x16xf32>
    %25 = tpu.matmul %22, %24, %cst_10 {dimension_numbers = #tpu.dot_dimension_numbers<[1], [0], [0], [1], [0, 0, 1, 1], [], []>} : vector<16x8xf32>, vector<8x16xf32>, vector<16x16xf32> -> vector<16x16xf32>
    %26 = arith.addf %25, %1 : vector<16x16xf32>
    %cst_11 = arith.constant dense<0xFF800000> : vector<16xf32>
    %27 = vector.multi_reduction <maximumf>, %26, %cst_11 [1] : vector<16x16xf32> to vector<16xf32>
    %28 = vector.shape_cast %27 : vector<16xf32> to vector<16x1xf32>
    %29 = vector.broadcast %28 : vector<16x1xf32> to vector<16x16xf32>
    %30 = arith.subf %26, %29 : vector<16x16xf32>
    %31 = math.exp %30 : vector<16x16xf32>
    %cst_12 = arith.constant dense<0.000000e+00> : vector<16xf32>
    %32 = vector.multi_reduction <add>, %31, %cst_12 [1] : vector<16x16xf32> to vector<16xf32>
    %33 = vector.shape_cast %32 : vector<16xf32> to vector<16x1xf32>
    %34 = tpu.reciprocal %33 : vector<16x1xf32> -> vector<16x1xf32>
    %35 = vector.broadcast %34 : vector<16x1xf32> to vector<16x16xf32>
    %36 = arith.mulf %31, %35 : vector<16x16xf32>
    %cst_13 = arith.constant dense<0.000000e+00> : vector<16x8xf32>
    %37 = tpu.matmul %36, %23, %cst_13 {dimension_numbers = #tpu.dot_dimension_numbers<[1], [0], [0], [1], [0, 0, 1, 1], [], []>} : vector<16x16xf32>, vector<16x8xf32>, vector<16x8xf32> -> vector<16x8xf32>
    %38 = vector.extract_strided_slice %4 {offsets = [0, 0], sizes = [8, 32], strides = [1, 1]} : vector<32x32xf32> to vector<8x32xf32>
    %cst_14 = arith.constant dense<0.000000e+00> : vector<16x32xf32>
    %39 = tpu.matmul %37, %38, %cst_14 {dimension_numbers = #tpu.dot_dimension_numbers<[1], [0], [0], [1], [0, 0, 1, 1], [], []>} : vector<16x8xf32>, vector<8x32xf32>, vector<16x32xf32> -> vector<16x32xf32>
    %40 = arith.addf %21, %39 : vector<16x32xf32>
    %41 = vector.extract_strided_slice %18 {offsets = [0, 8], sizes = [16, 8], strides = [1, 1]} : vector<16x96xf32> to vector<16x8xf32>
    %42 = vector.extract_strided_slice %18 {offsets = [0, 72], sizes = [16, 8], strides = [1, 1]} : vector<16x96xf32> to vector<16x8xf32>
    %43 = vector.extract_strided_slice %20 {offsets = [8, 0], sizes = [8, 16], strides = [1, 1]} : vector<32x16xf32> to vector<8x16xf32>
    %cst_15 = arith.constant dense<0.000000e+00> : vector<16x16xf32>
    %44 = tpu.matmul %41, %43, %cst_15 {dimension_numbers = #tpu.dot_dimension_numbers<[1], [0], [0], [1], [0, 0, 1, 1], [], []>} : vector<16x8xf32>, vector<8x16xf32>, vector<16x16xf32> -> vector<16x16xf32>
    %45 = arith.addf %44, %1 : vector<16x16xf32>
    %cst_16 = arith.constant dense<0xFF800000> : vector<16xf32>
    %46 = vector.multi_reduction <maximumf>, %45, %cst_16 [1] : vector<16x16xf32> to vector<16xf32>
    %47 = vector.shape_cast %46 : vector<16xf32> to vector<16x1xf32>
    %48 = vector.broadcast %47 : vector<16x1xf32> to vector<16x16xf32>
    %49 = arith.subf %45, %48 : vector<16x16xf32>
    %50 = math.exp %49 : vector<16x16xf32>
    %cst_17 = arith.constant dense<0.000000e+00> : vector<16xf32>
    %51 = vector.multi_reduction <add>, %50, %cst_17 [1] : vector<16x16xf32> to vector<16xf32>
    %52 = vector.shape_cast %51 : vector<16xf32> to vector<16x1xf32>
    %53 = tpu.reciprocal %52 : vector<16x1xf32> -> vector<16x1xf32>
    %54 = vector.broadcast %53 : vector<16x1xf32> to vector<16x16xf32>
    %55 = arith.mulf %50, %54 : vector<16x16xf32>
    %cst_18 = arith.constant dense<0.000000e+00> : vector<16x8xf32>
    %56 = tpu.matmul %55, %42, %cst_18 {dimension_numbers = #tpu.dot_dimension_numbers<[1], [0], [0], [1], [0, 0, 1, 1], [], []>} : vector<16x16xf32>, vector<16x8xf32>, vector<16x8xf32> -> vector<16x8xf32>
    %57 = vector.extract_strided_slice %4 {offsets = [8, 0], sizes = [8, 32], strides = [1, 1]} : vector<32x32xf32> to vector<8x32xf32>
    %cst_19 = arith.constant dense<0.000000e+00> : vector<16x32xf32>
    %58 = tpu.matmul %56, %57, %cst_19 {dimension_numbers = #tpu.dot_dimension_numbers<[1], [0], [0], [1], [0, 0, 1, 1], [], []>} : vector<16x8xf32>, vector<8x32xf32>, vector<16x32xf32> -> vector<16x32xf32>
    %59 = arith.addf %40, %58 : vector<16x32xf32>
    %60 = vector.extract_strided_slice %18 {offsets = [0, 16], sizes = [16, 8], strides = [1, 1]} : vector<16x96xf32> to vector<16x8xf32>
    %61 = vector.extract_strided_slice %18 {offsets = [0, 80], sizes = [16, 8], strides = [1, 1]} : vector<16x96xf32> to vector<16x8xf32>
    %62 = vector.extract_strided_slice %20 {offsets = [16, 0], sizes = [8, 16], strides = [1, 1]} : vector<32x16xf32> to vector<8x16xf32>
    %cst_20 = arith.constant dense<0.000000e+00> : vector<16x16xf32>
    %63 = tpu.matmul %60, %62, %cst_20 {dimension_numbers = #tpu.dot_dimension_numbers<[1], [0], [0], [1], [0, 0, 1, 1], [], []>} : vector<16x8xf32>, vector<8x16xf32>, vector<16x16xf32> -> vector<16x16xf32>
    %64 = arith.addf %63, %1 : vector<16x16xf32>
    %cst_21 = arith.constant dense<0xFF800000> : vector<16xf32>
    %65 = vector.multi_reduction <maximumf>, %64, %cst_21 [1] : vector<16x16xf32> to vector<16xf32>
    %66 = vector.shape_cast %65 : vector<16xf32> to vector<16x1xf32>
    %67 = vector.broadcast %66 : vector<16x1xf32> to vector<16x16xf32>
    %68 = arith.subf %64, %67 : vector<16x16xf32>
    %69 = math.exp %68 : vector<16x16xf32>
    %cst_22 = arith.constant dense<0.000000e+00> : vector<16xf32>
    %70 = vector.multi_reduction <add>, %69, %cst_22 [1] : vector<16x16xf32> to vector<16xf32>
    %71 = vector.shape_cast %70 : vector<16xf32> to vector<16x1xf32>
    %72 = tpu.reciprocal %71 : vector<16x1xf32> -> vector<16x1xf32>
    %73 = vector.broadcast %72 : vector<16x1xf32> to vector<16x16xf32>
    %74 = arith.mulf %69, %73 : vector<16x16xf32>
    %cst_23 = arith.constant dense<0.000000e+00> : vector<16x8xf32>
    %75 = tpu.matmul %74, %61, %cst_23 {dimension_numbers = #tpu.dot_dimension_numbers<[1], [0], [0], [1], [0, 0, 1, 1], [], []>} : vector<16x16xf32>, vector<16x8xf32>, vector<16x8xf32> -> vector<16x8xf32>
    %76 = vector.extract_strided_slice %4 {offsets = [16, 0], sizes = [8, 32], strides = [1, 1]} : vector<32x32xf32> to vector<8x32xf32>
    %cst_24 = arith.constant dense<0.000000e+00> : vector<16x32xf32>
    %77 = tpu.matmul %75, %76, %cst_24 {dimension_numbers = #tpu.dot_dimension_numbers<[1], [0], [0], [1], [0, 0, 1, 1], [], []>} : vector<16x8xf32>, vector<8x32xf32>, vector<16x32xf32> -> vector<16x32xf32>
    %78 = arith.addf %59, %77 : vector<16x32xf32>
    %79 = vector.extract_strided_slice %18 {offsets = [0, 24], sizes = [16, 8], strides = [1, 1]} : vector<16x96xf32> to vector<16x8xf32>
    %80 = vector.extract_strided_slice %18 {offsets = [0, 88], sizes = [16, 8], strides = [1, 1]} : vector<16x96xf32> to vector<16x8xf32>
    %81 = vector.extract_strided_slice %20 {offsets = [24, 0], sizes = [8, 16], strides = [1, 1]} : vector<32x16xf32> to vector<8x16xf32>
    %cst_25 = arith.constant dense<0.000000e+00> : vector<16x16xf32>
    %82 = tpu.matmul %79, %81, %cst_25 {dimension_numbers = #tpu.dot_dimension_numbers<[1], [0], [0], [1], [0, 0, 1, 1], [], []>} : vector<16x8xf32>, vector<8x16xf32>, vector<16x16xf32> -> vector<16x16xf32>
    %83 = arith.addf %82, %1 : vector<16x16xf32>
    %cst_26 = arith.constant dense<0xFF800000> : vector<16xf32>
    %84 = vector.multi_reduction <maximumf>, %83, %cst_26 [1] : vector<16x16xf32> to vector<16xf32>
    %85 = vector.shape_cast %84 : vector<16xf32> to vector<16x1xf32>
    %86 = vector.broadcast %85 : vector<16x1xf32> to vector<16x16xf32>
    %87 = arith.subf %83, %86 : vector<16x16xf32>
    %88 = math.exp %87 : vector<16x16xf32>
    %cst_27 = arith.constant dense<0.000000e+00> : vector<16xf32>
    %89 = vector.multi_reduction <add>, %88, %cst_27 [1] : vector<16x16xf32> to vector<16xf32>
    %90 = vector.shape_cast %89 : vector<16xf32> to vector<16x1xf32>
    %91 = tpu.reciprocal %90 : vector<16x1xf32> -> vector<16x1xf32>
    %92 = vector.broadcast %91 : vector<16x1xf32> to vector<16x16xf32>
    %93 = arith.mulf %88, %92 : vector<16x16xf32>
    %cst_28 = arith.constant dense<0.000000e+00> : vector<16x8xf32>
    %94 = tpu.matmul %93, %80, %cst_28 {dimension_numbers = #tpu.dot_dimension_numbers<[1], [0], [0], [1], [0, 0, 1, 1], [], []>} : vector<16x16xf32>, vector<16x8xf32>, vector<16x8xf32> -> vector<16x8xf32>
    %95 = vector.extract_strided_slice %4 {offsets = [24, 0], sizes = [8, 32], strides = [1, 1]} : vector<32x32xf32> to vector<8x32xf32>
    %cst_29 = arith.constant dense<0.000000e+00> : vector<16x32xf32>
    %96 = tpu.matmul %94, %95, %cst_29 {dimension_numbers = #tpu.dot_dimension_numbers<[1], [0], [0], [1], [0, 0, 1, 1], [], []>} : vector<16x8xf32>, vector<8x32xf32>, vector<16x32xf32> -> vector<16x32xf32>
    %97 = arith.addf %78, %96 : vector<16x32xf32>
    %98 = vector.broadcast %8 : vector<1x32xf32> to vector<16x32xf32>
    %99 = arith.addf %97, %98 : vector<16x32xf32>
    %100 = arith.addf %0, %99 : vector<16x32xf32>
    %cst_30 = arith.constant dense<0.000000e+00> : vector<16xf32>
    %101 = vector.multi_reduction <add>, %100, %cst_30 [1] : vector<16x32xf32> to vector<16xf32>
    %102 = vector.shape_cast %101 : vector<16xf32> to vector<16x1xf32>
    %cst_31 = arith.constant 3.200000e+01 : f32
    %103 = vector.broadcast %cst_31 : f32 to vector<16x1xf32>
    %104 = arith.divf %102, %103 : vector<16x1xf32>
    %105 = vector.broadcast %104 : vector<16x1xf32> to vector<16x32xf32>
    %106 = arith.subf %100, %105 : vector<16x32xf32>
    %107 = arith.mulf %106, %106 : vector<16x32xf32>
    %cst_32 = arith.constant dense<0.000000e+00> : vector<16xf32>
    %108 = vector.multi_reduction <add>, %107, %cst_32 [1] : vector<16x32xf32> to vector<16xf32>
    %109 = vector.shape_cast %108 : vector<16xf32> to vector<16x1xf32>
    %cst_33 = arith.constant 3.200000e+01 : f32
    %110 = vector.broadcast %cst_33 : f32 to vector<16x1xf32>
    %111 = arith.divf %109, %110 : vector<16x1xf32>
    %112 = vector.broadcast %104 : vector<16x1xf32> to vector<16x32xf32>
    %113 = arith.subf %100, %112 : vector<16x32xf32>
    %cst_34 = arith.constant 9.99999974E-6 : f32
    %114 = vector.broadcast %cst_34 : f32 to vector<16x1xf32>
    %115 = arith.addf %111, %114 : vector<16x1xf32>
    %116 = math.rsqrt %115 : vector<16x1xf32>
    %117 = vector.broadcast %116 : vector<16x1xf32> to vector<16x32xf32>
    %118 = arith.mulf %113, %117 : vector<16x32xf32>
    %119 = vector.broadcast %11 : vector<1x32xf32> to vector<16x32xf32>
    %120 = arith.mulf %118, %119 : vector<16x32xf32>
    %121 = vector.broadcast %12 : vector<1x32xf32> to vector<16x32xf32>
    %122 = arith.addf %120, %121 : vector<16x32xf32>
    %cst_35 = arith.constant dense<0.000000e+00> : vector<16x32xf32>
    %123 = tpu.matmul %99, %5, %cst_35 {dimension_numbers = #tpu.dot_dimension_numbers<[1], [0], [0], [1], [0, 0, 1, 1], [], []>} : vector<16x32xf32>, vector<32x32xf32>, vector<16x32xf32> -> vector<16x32xf32>
    %124 = vector.broadcast %9 : vector<1x32xf32> to vector<16x32xf32>
    %125 = arith.addf %123, %124 : vector<16x32xf32>
    %cst_36 = arith.constant 0.000000e+00 : f32
    %126 = vector.broadcast %cst_36 : f32 to vector<16x32xf32>
    %127 = arith.maximumf %125, %126 : vector<16x32xf32>
    %cst_37 = arith.constant dense<0.000000e+00> : vector<16x32xf32>
    %128 = tpu.matmul %127, %6, %cst_37 {dimension_numbers = #tpu.dot_dimension_numbers<[1], [0], [0], [1], [0, 0, 1, 1], [], []>} : vector<16x32xf32>, vector<32x32xf32>, vector<16x32xf32> -> vector<16x32xf32>
    %129 = vector.broadcast %10 : vector<1x32xf32> to vector<16x32xf32>
    %130 = arith.addf %128, %129 : vector<16x32xf32>
    %131 = arith.addf %122, %130 : vector<16x32xf32>
    %cst_38 = arith.constant dense<0.000000e+00> : vector<16xf32>
    %132 = vector.multi_reduction <add>, %131, %cst_38 [1] : vector<16x32xf32> to vector<16xf32>
    %133 = vector.shape_cast %132 : vector<16xf32> to vector<16x1xf32>
    %cst_39 = arith.constant 3.200000e+01 : f32
    %134 = vector.broadcast %cst_39 : f32 to vector<16x1xf32>
    %135 = arith.divf %133, %134 : vector<16x1xf32>
    %136 = vector.broadcast %135 : vector<16x1xf32> to vector<16x32xf32>
    %137 = arith.subf %131, %136 : vector<16x32xf32>
    %138 = arith.mulf %137, %137 : vector<16x32xf32>
    %cst_40 = arith.constant dense<0.000000e+00> : vector<16xf32>
    %139 = vector.multi_reduction <add>, %138, %cst_40 [1] : vector<16x32xf32> to vector<16xf32>
    %140 = vector.shape_cast %139 : vector<16xf32> to vector<16x1xf32>
    %cst_41 = arith.constant 3.200000e+01 : f32
    %141 = vector.broadcast %cst_41 : f32 to vector<16x1xf32>
    %142 = arith.divf %140, %141 : vector<16x1xf32>
    %143 = vector.broadcast %135 : vector<16x1xf32> to vector<16x32xf32>
    %144 = arith.subf %131, %143 : vector<16x32xf32>
    %cst_42 = arith.constant 9.99999974E-6 : f32
    %145 = vector.broadcast %cst_42 : f32 to vector<16x1xf32>
    %146 = arith.addf %142, %145 : vector<16x1xf32>
    %147 = math.rsqrt %146 : vector<16x1xf32>
    %148 = vector.broadcast %147 : vector<16x1xf32> to vector<16x32xf32>
    %149 = arith.mulf %144, %148 : vector<16x32xf32>
    %150 = vector.broadcast %13 : vector<1x32xf32> to vector<16x32xf32>
    %151 = arith.mulf %149, %150 : vector<16x32xf32>
    %152 = vector.broadcast %14 : vector<1x32xf32> to vector<16x32xf32>
    %153 = arith.addf %151, %152 : vector<16x32xf32>
    %c0_43 = arith.constant 0 : index
    %c0_44 = arith.constant 0 : index
    %154 = vector.load %arg5[%c0_43, %c0_44] : memref<16x32xf32, #tpu.memory_space<vmem>>, vector<16x32xf32>
    tpu.vector_store %arg5[%c0_43, %c0_44], %153 {strides = array<i32>} : memref<16x32xf32, #tpu.memory_space<vmem>>, vector<16x32xf32>,
    return
  }
}

</mosaic_0001>

<llo_original>
// kernel: encoder_layer_forward.1
$region0: #{encoder_layer_forward.1}
  #allocation0 [shape = 'u32[]', space=smem, size = 0x4, offset = 0x4, fixed_abs, tag = 'smem constant byte address 0x4 - core index']
  #allocation1 [shape = 'u32[144,128]{1,0:T(1,128)}', space=vmem, size = 0x12000, scoped, tag = 'internal scratch']
  %s0 = inlined_call_operand.hbm [shape: f32[16,32], index: 0, kind: input, shape index: {}]
  %s1 = inlined_call_operand.hbm [shape: f32[16,16], index: 1, kind: input, shape index: {}]
  %s2 = inlined_call_operand.hbm [shape: f32[32,192], index: 2, kind: input, shape index: {}]
  %s3 = inlined_call_operand.vmem [shape: f32[1,96], index: 3, kind: input, shape index: {}]
  %s4 = inlined_call_operand.hbm [shape: f32[8,32], index: 4, kind: input, shape index: {}]
  %s5 = inlined_call_operand.hbm [shape: f32[16,32], index: 5, kind: output, shape index: {}]
  %s6 = sld [smem:[#allocation0]]
  $region46: #{encoder_layer_forward.1} parent=0
    _
  %s8 = ssub.s32 1, %s6
  %s9 = scalar_select 0, %s8, %s6
  $region1: #{encoder_layer_forward.1} parent=0
    #allocation2 [shape = 'u8[8192]{0}', space=vmem, size = 0x2000, scoped, tag = 'input window, operand 0, single buffered']
    #allocation3 [shape = 's32[1]{0}', space=sflag, size = 0x4, scoped, tag = 'scoped memory for encoder_layer_forward.1']
    #allocation4 [shape = 's32[1]{0}', space=sflag, size = 0x4, scoped, tag = 'scoped memory for encoder_layer_forward.1']
    #allocation5 [shape = 'u8[8192]{0}', space=vmem, size = 0x2000, scoped, tag = 'input window, operand 1, single buffered']
    #allocation6 [shape = 's32[1]{0}', space=sflag, size = 0x4, scoped, tag = 'scoped memory for encoder_layer_forward.1']
    #allocation7 [shape = 'u8[32768]{0}', space=vmem, size = 0x8000, scoped, tag = 'input window, operand 2, single buffered']
    #allocation8 [shape = 'u8[4096]{0}', space=vmem, size = 0x1000, scoped, tag = 'input window, operand 4, single buffered']
    #allocation9 [shape = 's32[1]{0}', space=sflag, size = 0x4, scoped, tag = 'scoped memory for encoder_layer_forward.1']
    #allocation10 [shape = 'u8[8192]{0}', space=vmem, size = 0x2000, scoped, tag = 'output window, operand 0, single buffered']
    %10 = vsyncpa [#allocation3], 0
    %11 = vsyncpa [#allocation6], 0
    %12 = vsyncpa [#allocation9], 0
    %13 = vsyncpa [#allocation4], 0
    // Predicated region
    $region2: #{encoder_layer_forward.1} parent=1 // pred_check
      _
    $region3: #{encoder_layer_forward.1} parent=1 // pred_check_branch
      %15 = sbr.rel (0) target = $region5
    $region4: #{encoder_layer_forward.1} parent=1 // pred_region
      %s17 = ssub.s32 256, 256
      %18 = vsyncadd [#allocation3], %s17
      %s19 = sshll.u32 [#allocation2], 4
      %s20 = int_to_ptr.vmem [resolvable:$true] %s19
      %25 = dma.hbm_to_vmem [thread:$0]  %s0, 256, %s20, [#allocation3], 128, 128, 8
    $region5: #{encoder_layer_forward.1} parent=1 // pred_fallthru
      _
    // Predicated region
    $region6: #{encoder_layer_forward.1} parent=1 // pred_check
      _
    $region7: #{encoder_layer_forward.1} parent=1 // pred_check_branch
      %27 = sbr.rel (0) target = $region9
    $region8: #{encoder_layer_forward.1} parent=1 // pred_region
      %s29 = ssub.s32 256, 256
      %30 = vsyncadd [#allocation6], %s29
      %s31 = sshll.u32 [#allocation5], 4
      %s32 = int_to_ptr.vmem [resolvable:$true] %s31
      %37 = dma.hbm_to_vmem [thread:$0]  %s1, 256, %s32, [#allocation6], 128, 128, 8
    $region9: #{encoder_layer_forward.1} parent=1 // pred_fallthru
      _
    // Predicated region
    $region10: #{encoder_layer_forward.1} parent=1 // pred_check
      _
    $region11: #{encoder_layer_forward.1} parent=1 // pred_check_branch
      %39 = sbr.rel (0) target = $region13
    $region12: #{encoder_layer_forward.1} parent=1 // pred_region
      %s41 = ssub.s32 1024, 1024
      %42 = vsyncadd [#allocation6], %s41
      %s43 = sshll.u32 [#allocation7], 4
      %s44 = int_to_ptr.vmem [resolvable:$true] %s43
      %49 = dma.hbm_to_vmem [thread:$0]  %s2, 1024, %s44, [#allocation6], 256, 256, 16
    $region13: #{encoder_layer_forward.1} parent=1 // pred_fallthru
      _
    // Predicated region
    $region14: #{encoder_layer_forward.1} parent=1 // pred_check
      _
    $region15: #{encoder_layer_forward.1} parent=1 // pred_check_branch
      %51 = sbr.rel (0) target = $region17
    $region16: #{encoder_layer_forward.1} parent=1 // pred_region
      _
    $region17: #{encoder_layer_forward.1} parent=1 // pred_fallthru
      _
    // Predicated region
    $region18: #{encoder_layer_forward.1} parent=1 // pred_check
      _
    $region19: #{encoder_layer_forward.1} parent=1 // pred_check_branch
      %53 = sbr.rel (0) target = $region21
    $region20: #{encoder_layer_forward.1} parent=1 // pred_region
      %s55 = ssub.s32 128, 128
      %56 = vsyncadd [#allocation9], %s55
      %s58 = sshll.u32 [#allocation8], 4
      %s59 = int_to_ptr.vmem [resolvable:$true] %s58
      %61 = dma.hbm_to_vmem [thread:$0]  %s4, 128, %s59, [#allocation9]
    $region21: #{encoder_layer_forward.1} parent=1 // pred_fallthru
      _
    // Predicated region
    $region22: #{encoder_layer_forward.1} parent=1 // pred_check
      _
    $region23: #{encoder_layer_forward.1} parent=1 // pred_check_branch
      %63 = sbr.rel (0) target = $region25
    $region24: #{encoder_layer_forward.1} parent=1 // pred_region
      %64 = dma.done [#allocation3], 256
    $region25: #{encoder_layer_forward.1} parent=1 // pred_fallthru
      _
    // Predicated region
    $region26: #{encoder_layer_forward.1} parent=1 // pred_check
      _
    $region27: #{encoder_layer_forward.1} parent=1 // pred_check_branch
      %66 = sbr.rel (0) target = $region29
    $region28: #{encoder_layer_forward.1} parent=1 // pred_region
      %67 = dma.done [#allocation6], 256
    $region29: #{encoder_layer_forward.1} parent=1 // pred_fallthru
      _
    // Predicated region
    $region30: #{encoder_layer_forward.1} parent=1 // pred_check
      _
    $region31: #{encoder_layer_forward.1} parent=1 // pred_check_branch
      %69 = sbr.rel (0) target = $region33
    $region32: #{encoder_layer_forward.1} parent=1 // pred_region
      %70 = dma.done [#allocation6], 1024
    $region33: #{encoder_layer_forward.1} parent=1 // pred_fallthru
      _
    // Predicated region
    $region34: #{encoder_layer_forward.1} parent=1 // pred_check
      _
    $region35: #{encoder_layer_forward.1} parent=1 // pred_check_branch
      %72 = sbr.rel (0) target = $region37
    $region36: #{encoder_layer_forward.1} parent=1 // pred_region
      %73 = dma.done [#allocation9], 128
    $region37: #{encoder_layer_forward.1} parent=1 // pred_fallthru
      _
    %v74 = vld [vmem:[#allocation2] sm:$0xff]
    %v75 = vld [vmem:[#allocation2 + $0x8] sm:$0xff]
    %v76 = vld [vmem:[#allocation5] sm:$0xff]
    %v77 = vld [vmem:[#allocation5 + $0x8] sm:$0xff]
    %v78 = vld [vmem:[#allocation7] sm:$0xff]
    %v79 = vld [vmem:[#allocation7 + $0x8] sm:$0xff]
    %v80 = vld [vmem:[#allocation7 + $0x10] sm:$0xff]
    %v81 = vld [vmem:[#allocation7 + $0x18] sm:$0xff]
    %v82 = vld [vmem:[#allocation7 + $0x20] sm:$0xff]
    %v83 = vld [vmem:[#allocation7 + $0x28] sm:$0xff]
    %v84 = vld [vmem:[#allocation7 + $0x30] sm:$0xff]
    %v85 = vld [vmem:[#allocation7 + $0x38] sm:$0xff]
    %v86 = vld [vmem:[#allocation8] sm:$0xff]
    %v87 = vld [vmem:[%s3] sm:$0x1]
    %v89 = vlaneseq
    %v90 = vshrl.u32 %v89, 7
    %v91 = vsub.s32 0, %v90
    %v92 = vrot.slane %v87, %v91
    %vm94 = vcmask 261120
    %v96 = vsel %vm94, %v74, 0
    %v99 = vsel %vm94, %v75, 0
    %101 = vmatprep.subr.mxu0 0.0
    %102 = vmatpush1.msra.mxu0 0.0
    %103 = vmatprep.subr.mxu0 0.0
    %104 = vmatpush1.msra.mxu0 0.0
    %105 = vmatprep.subr.mxu0 0.0
    %106 = vmatpush1.msra.mxu0 0.0
    %107 = vmatprep.subr.mxu0 0.0
    %108 = vmatpush1.msra.mxu0 0.0
    %109 = vmatprep.subr.mxu0 0.0
    %110 = vmatpush1.msra.mxu0 0.0
    %111 = vmatprep.subr.mxu0 0.0
    %112 = vmatpush1.msra.mxu0 0.0
    %113 = vmatprep.subr.mxu0 0.0
    %114 = vmatpush1.msra.mxu0 0.0
    %115 = vmatprep.subr.mxu0 0.0
    %116 = vmatpush1.msra.mxu0 0.0
    %117 = vmatprep.subr.mxu0 0.0
    %118 = vmatpush1.msra.mxu0 0.0
    %119 = vmatprep.subr.mxu0 0.0
    %120 = vmatpush1.msra.mxu0 0.0
    %121 = vmatprep.subr.mxu0 0.0
    %122 = vmatpush1.msra.mxu0 0.0
    %123 = vmatprep.subr.mxu0 0.0
    %124 = vmatpush1.msra.mxu0 0.0
    %125 = vmatprep.subr.mxu0 0.0
    %126 = vmatpush1.msra.mxu0 %v84
    %127 = vmatprep.subr.mxu0 0.0
    %128 = vmatpush1.msra.mxu0 %v82
    %129 = vmatprep.subr.mxu0 0.0
    %130 = vmatpush1.msra.mxu0 %v80
    %131 = vmatprep.subr.mxu0 0.0
    %132 = vmatpush1.msra.mxu0 %v78
    %133 = vmatprep.subr.mxu0 0.0
    %134 = vmatpush2.msra.mxu0 0.0
    %135 = vmatprep.subr.mxu0 0.0
    %136 = vmatpush2.msra.mxu0 0.0
    %137 = vmatprep.subr.mxu0 0.0
    %138 = vmatpush2.msra.mxu0 0.0
    %139 = vmatprep.subr.mxu0 0.0
    %140 = vmatpush2.msra.mxu0 0.0
    %141 = vmatprep.subr.mxu0 0.0
    %142 = vmatpush2.msra.mxu0 0.0
    %143 = vmatprep.subr.mxu0 0.0
    %144 = vmatpush2.msra.mxu0 0.0
    %145 = vmatprep.subr.mxu0 0.0
    %146 = vmatpush2.msra.mxu0 0.0
    %147 = vmatprep.subr.mxu0 0.0
    %148 = vmatpush2.msra.mxu0 0.0
    %149 = vmatprep.subr.mxu0 0.0
    %150 = vmatpush2.msra.mxu0 0.0
    %151 = vmatprep.subr.mxu0 0.0
    %152 = vmatpush2.msra.mxu0 0.0
    %153 = vmatprep.subr.mxu0 0.0
    %154 = vmatpush2.msra.mxu0 0.0
    %155 = vmatprep.subr.mxu0 0.0
    %156 = vmatpush2.msra.mxu0 0.0
    %157 = vmatprep.subr.mxu0 0.0
    %158 = vmatpush2.msra.mxu0 0.0
    %159 = vmatprep.subr.mxu0 0.0
    %160 = vmatpush2.msra.mxu0 0.0
    %161 = vmatprep.subr.mxu0 0.0
    %162 = vmatpush2.msra.mxu0 0.0
    %163 = vmatprep.subr.mxu0 0.0
    %164 = vmatpush2.msra.mxu0 0.0
    %165 = vmatprep.mubr.f32.mxu0 0.0
    %166 = vmatmul.mubr.f32.gmra.mxu0 %v96
    %v167 = vpop.f32.mrf.mxu0
    %v168 = vadd.f32 %v92, %v167
    %v169 = vpop.f32.mrf.mxu0
    %170 = vmatprep.mubr.f32.mxu0 0.0
    %171 = vmatmul.mubr.f32.gmra.mxu0 %v99
    %v172 = vpop.f32.mrf.mxu0
    %v173 = vadd.f32 %v92, %v172
    %v174 = vpop.f32.mrf.mxu0
    %175 = vdwg.mxu0
    %178 = vrot.lane.b32.xlu0 %v168, 96
    %v179 = vpop.permute.xlu0 %178
    %180 = vrot.lane.b32.xlu0 %v173, 96
    %v181 = vpop.permute.xlu0 %180
    %vm182 = vcmask 64512
    %v183 = vsel %vm182, %v168, 0
    %v185 = vsel %vm182, %v173, 0
    %v187 = vsel %vm182, %v179, 0
    %v189 = vsel %vm182, %v181, 0
    %191 = vmatprep.subr.mxu0 0.0
    %192 = vmatpush1.xpose.msra.mxu0 0.0
    %193 = vmatprep.subr.mxu0 0.0
    %194 = vmatpush1.xpose.msra.mxu0 0.0
    %195 = vmatprep.subr.mxu0 0.0
    %196 = vmatpush1.xpose.msra.mxu0 0.0
    %197 = vmatprep.subr.mxu0 0.0
    %198 = vmatpush1.xpose.msra.mxu0 0.0
    %199 = vmatprep.subr.mxu0 0.0
    %200 = vmatpush1.xpose.msra.mxu0 0.0
    %201 = vmatprep.subr.mxu0 0.0
    %202 = vmatpush1.xpose.msra.mxu0 0.0
    %203 = vmatprep.subr.mxu0 0.0
    %204 = vmatpush1.xpose.msra.mxu0 0.0
    %205 = vmatprep.subr.mxu0 0.0
    %206 = vmatpush1.xpose.msra.mxu0 0.0
    %207 = vmatprep.subr.mxu0 0.0
    %208 = vmatpush1.xpose.msra.mxu0 0.0
    %209 = vmatprep.subr.mxu0 0.0
    %210 = vmatpush1.xpose.msra.mxu0 0.0
    %211 = vmatprep.subr.mxu0 0.0
    %212 = vmatpush1.xpose.msra.mxu0 0.0
    %213 = vmatprep.subr.mxu0 0.0
    %214 = vmatpush1.xpose.msra.mxu0 0.0
    %215 = vmatprep.subr.mxu0 0.0
    %216 = vmatpush1.xpose.msra.mxu0 0.0
    %217 = vmatprep.subr.mxu0 0.0
    %218 = vmatpush1.xpose.msra.mxu0 0.0
    %219 = vmatprep.subr.mxu0 0.0
    %220 = vmatpush1.xpose.msra.mxu0 %v189
    %221 = vmatprep.subr.mxu0 0.0
    %222 = vmatpush1.xpose.msra.mxu0 %v187
    %223 = vmatprep.subr.mxu0 0.0
    %224 = vmatpush2.xpose.msra.mxu0 0.0
    %225 = vmatprep.subr.mxu0 0.0
    %226 = vmatpush2.xpose.msra.mxu0 0.0
    %227 = vmatprep.subr.mxu0 0.0
    %228 = vmatpush2.xpose.msra.mxu0 0.0
    %229 = vmatprep.subr.mxu0 0.0
    %230 = vmatpush2.xpose.msra.mxu0 0.0
    %231 = vmatprep.subr.mxu0 0.0
    %232 = vmatpush2.xpose.msra.mxu0 0.0
    %233 = vmatprep.subr.mxu0 0.0
    %234 = vmatpush2.xpose.msra.mxu0 0.0
    %235 = vmatprep.subr.mxu0 0.0
    %236 = vmatpush2.xpose.msra.mxu0 0.0
    %237 = vmatprep.subr.mxu0 0.0
    %238 = vmatpush2.xpose.msra.mxu0 0.0
    %239 = vmatprep.subr.mxu0 0.0
    %240 = vmatpush2.xpose.msra.mxu0 0.0
    %241 = vmatprep.subr.mxu0 0.0
    %242 = vmatpush2.xpose.msra.mxu0 0.0
    %243 = vmatprep.subr.mxu0 0.0
    %244 = vmatpush2.xpose.msra.mxu0 0.0
    %245 = vmatprep.subr.mxu0 0.0
    %246 = vmatpush2.xpose.msra.mxu0 0.0
    %247 = vmatprep.subr.mxu0 0.0
    %248 = vmatpush2.xpose.msra.mxu0 0.0
    %249 = vmatprep.subr.mxu0 0.0
    %250 = vmatpush2.xpose.msra.mxu0 0.0
    %251 = vmatprep.subr.mxu0 0.0
    %252 = vmatpush2.xpose.msra.mxu0 0.0
    %253 = vmatprep.subr.mxu0 0.0
    %254 = vmatpush2.xpose.msra.mxu0 0.0
    %255 = vmatprep.mubr.f32.mxu0 0.0
    %256 = vmatmul.mubr.f32.gmra.mxu0 %v183
    %v257 = vpop.f32.mrf.mxu0
    %v258 = vadd.f32 %v76, %v257
    %v259 = vpop.f32.mrf.mxu0
    %260 = vmatprep.mubr.f32.mxu0 0.0
    %261 = vmatmul.mubr.f32.gmra.mxu0 %v185
    %v262 = vpop.f32.mrf.mxu0
    %v263 = vadd.f32 %v77, %v262
    %v264 = vpop.f32.mrf.mxu0
    %265 = vdwg.mxu0
    %vm266 = vcmask 130048
    %v267 = vsel %vm266, %v258, -inf
    %268 = vmax.xlane.f32.xlu0 %v267
    %v269 = vpop.xlane.xlu0 %268
    %v270 = vsel %vm266, %v263, -inf
    %271 = vmax.xlane.f32.xlu0 %v270
    %v272 = vpop.xlane.xlu0 %271
    %v273 = vsub.f32 %v258, %v269
    %v274 = vsub.f32 %v263, %v272
    %v275 = vmul.f32 %v273, 1.442695
    %v276 = vpow.pop %v275
    %v277 = vmul.f32 %v274, 1.442695
    %v278 = vpow.pop %v277
    %v279 = vsel %vm266, %v276, 0.0
    %280 = vadd.xlane.f32.xlu0 %v279
    %v281 = vpop.xlane.xlu0 %280
    %v282 = vsel %vm266, %v278, 0.0
    %283 = vadd.xlane.f32.xlu0 %v282
    %v284 = vpop.xlane.xlu0 %283
    %v285 = vrcp.pop %v281
    %v286 = vrcp.pop %v284
    %v287 = vmul.f32 %v276, %v285
    %v288 = vmul.f32 %v278, %v286
    %289 = vrot.lane.b32.xlu0 %v168, 64
    %v290 = vpop.permute.xlu0 %289
    %291 = vrot.lane.b32.xlu0 %v173, 64
    %v292 = vpop.permute.xlu0 %291
    %v296 = vsel %vm266, %v287, 0
    %v299 = vsel %vm266, %v288, 0
    %301 = vmatprep.subr.mxu0 0.0
    %302 = vmatpush1.msra.mxu0 0.0
    %303 = vmatprep.subr.mxu0 0.0
    %304 = vmatpush1.msra.mxu0 0.0
    %305 = vmatprep.subr.mxu0 0.0
    %306 = vmatpush1.msra.mxu0 0.0
    %307 = vmatprep.subr.mxu0 0.0
    %308 = vmatpush1.msra.mxu0 0.0
    %309 = vmatprep.subr.mxu0 0.0
    %310 = vmatpush1.msra.mxu0 0.0
    %311 = vmatprep.subr.mxu0 0.0
    %312 = vmatpush1.msra.mxu0 0.0
    %313 = vmatprep.subr.mxu0 0.0
    %314 = vmatpush1.msra.mxu0 0.0
    %315 = vmatprep.subr.mxu0 0.0
    %316 = vmatpush1.msra.mxu0 0.0
    %317 = vmatprep.subr.mxu0 0.0
    %318 = vmatpush1.msra.mxu0 0.0
    %319 = vmatprep.subr.mxu0 0.0
    %320 = vmatpush1.msra.mxu0 0.0
    %321 = vmatprep.subr.mxu0 0.0
    %322 = vmatpush1.msra.mxu0 0.0
    %323 = vmatprep.subr.mxu0 0.0
    %324 = vmatpush1.msra.mxu0 0.0
    %325 = vmatprep.subr.mxu0 0.0
    %326 = vmatpush1.msra.mxu0 0.0
    %327 = vmatprep.subr.mxu0 0.0
    %328 = vmatpush1.msra.mxu0 0.0
    %329 = vmatprep.subr.mxu0 0.0
    %330 = vmatpush1.msra.mxu0 %v292
    %331 = vmatprep.subr.mxu0 0.0
    %332 = vmatpush1.msra.mxu0 %v290
    %333 = vmatprep.subr.mxu0 0.0
    %334 = vmatpush2.msra.mxu0 0.0
    %335 = vmatprep.subr.mxu0 0.0
    %336 = vmatpush2.msra.mxu0 0.0
    %337 = vmatprep.subr.mxu0 0.0
    %338 = vmatpush2.msra.mxu0 0.0
    %339 = vmatprep.subr.mxu0 0.0
    %340 = vmatpush2.msra.mxu0 0.0
    %341 = vmatprep.subr.mxu0 0.0
    %342 = vmatpush2.msra.mxu0 0.0
    %343 = vmatprep.subr.mxu0 0.0
    %344 = vmatpush2.msra.mxu0 0.0
    %345 = vmatprep.subr.mxu0 0.0
    %346 = vmatpush2.msra.mxu0 0.0
    %347 = vmatprep.subr.mxu0 0.0
    %348 = vmatpush2.msra.mxu0 0.0
    %349 = vmatprep.subr.mxu0 0.0
    %350 = vmatpush2.msra.mxu0 0.0
    %351 = vmatprep.subr.mxu0 0.0
    %352 = vmatpush2.msra.mxu0 0.0
    %353 = vmatprep.subr.mxu0 0.0
    %354 = vmatpush2.msra.mxu0 0.0
    %355 = vmatprep.subr.mxu0 0.0
    %356 = vmatpush2.msra.mxu0 0.0
    %357 = vmatprep.subr.mxu0 0.0
    %358 = vmatpush2.msra.mxu0 0.0
    %359 = vmatprep.subr.mxu0 0.0
    %360 = vmatpush2.msra.mxu0 0.0
    %361 = vmatprep.subr.mxu0 0.0
    %362 = vmatpush2.msra.mxu0 0.0
    %363 = vmatprep.subr.mxu0 0.0
    %364 = vmatpush2.msra.mxu0 0.0
    %365 = vmatprep.mubr.f32.mxu0 0.0
    %366 = vmatmul.mubr.f32.gmra.mxu0 %v296
    %v367 = vpop.f32.mrf.mxu0
    %v368 = vadd.f32 0.0, %v367
    %v369 = vpop.f32.mrf.mxu0
    %370 = vmatprep.mubr.f32.mxu0 0.0
    %371 = vmatmul.mubr.f32.gmra.mxu0 %v299
    %v372 = vpop.f32.mrf.mxu0
    %v373 = vadd.f32 0.0, %v372
    %v374 = vpop.f32.mrf.mxu0
    %375 = vdwg.mxu0
    %376 = vrot.lane.b32.xlu0 %v168, 120
    %v377 = vpop.permute.xlu0 %376
    %378 = vrot.lane.b32.xlu0 %v173, 120
    %v379 = vpop.permute.xlu0 %378
    %380 = vrot.lane.b32.xlu0 %v168, 88
    %v381 = vpop.permute.xlu0 %380
    %382 = vrot.lane.b32.xlu0 %v173, 88
    %v383 = vpop.permute.xlu0 %382
    %v384 = vsel %vm182, %v377, 0
    %v386 = vsel %vm182, %v379, 0
    %v388 = vsel %vm182, %v381, 0
    %v390 = vsel %vm182, %v383, 0
    %392 = vmatprep.subr.mxu0 0.0
    %393 = vmatpush1.xpose.msra.mxu0 0.0
    %394 = vmatprep.subr.mxu0 0.0
    %395 = vmatpush1.xpose.msra.mxu0 0.0
    %396 = vmatprep.subr.mxu0 0.0
    %397 = vmatpush1.xpose.msra.mxu0 0.0
    %398 = vmatprep.subr.mxu0 0.0
    %399 = vmatpush1.xpose.msra.mxu0 0.0
    %400 = vmatprep.subr.mxu0 0.0
    %401 = vmatpush1.xpose.msra.mxu0 0.0
    %402 = vmatprep.subr.mxu0 0.0
    %403 = vmatpush1.xpose.msra.mxu0 0.0
    %404 = vmatprep.subr.mxu0 0.0
    %405 = vmatpush1.xpose.msra.mxu0 0.0
    %406 = vmatprep.subr.mxu0 0.0
    %407 = vmatpush1.xpose.msra.mxu0 0.0
    %408 = vmatprep.subr.mxu0 0.0
    %409 = vmatpush1.xpose.msra.mxu0 0.0
    %410 = vmatprep.subr.mxu0 0.0
    %411 = vmatpush1.xpose.msra.mxu0 0.0
    %412 = vmatprep.subr.mxu0 0.0
    %413 = vmatpush1.xpose.msra.mxu0 0.0
    %414 = vmatprep.subr.mxu0 0.0
    %415 = vmatpush1.xpose.msra.mxu0 0.0
    %416 = vmatprep.subr.mxu0 0.0
    %417 = vmatpush1.xpose.msra.mxu0 0.0
    %418 = vmatprep.subr.mxu0 0.0
    %419 = vmatpush1.xpose.msra.mxu0 0.0
    %420 = vmatprep.subr.mxu0 0.0
    %421 = vmatpush1.xpose.msra.mxu0 %v390
    %422 = vmatprep.subr.mxu0 0.0
    %423 = vmatpush1.xpose.msra.mxu0 %v388
    %424 = vmatprep.subr.mxu0 0.0
    %425 = vmatpush2.xpose.msra.mxu0 0.0
    %426 = vmatprep.subr.mxu0 0.0
    %427 = vmatpush2.xpose.msra.mxu0 0.0
    %428 = vmatprep.subr.mxu0 0.0
    %429 = vmatpush2.xpose.msra.mxu0 0.0
    %430 = vmatprep.subr.mxu0 0.0
    %431 = vmatpush2.xpose.msra.mxu0 0.0
    %432 = vmatprep.subr.mxu0 0.0
    %433 = vmatpush2.xpose.msra.mxu0 0.0
    %434 = vmatprep.subr.mxu0 0.0
    %435 = vmatpush2.xpose.msra.mxu0 0.0
    %436 = vmatprep.subr.mxu0 0.0
    %437 = vmatpush2.xpose.msra.mxu0 0.0
    %438 = vmatprep.subr.mxu0 0.0
    %439 = vmatpush2.xpose.msra.mxu0 0.0
    %440 = vmatprep.subr.mxu0 0.0
    %441 = vmatpush2.xpose.msra.mxu0 0.0
    %442 = vmatprep.subr.mxu0 0.0
    %443 = vmatpush2.xpose.msra.mxu0 0.0
    %444 = vmatprep.subr.mxu0 0.0
    %445 = vmatpush2.xpose.msra.mxu0 0.0
    %446 = vmatprep.subr.mxu0 0.0
    %447 = vmatpush2.xpose.msra.mxu0 0.0
    %448 = vmatprep.subr.mxu0 0.0
    %449 = vmatpush2.xpose.msra.mxu0 0.0
    %450 = vmatprep.subr.mxu0 0.0
    %451 = vmatpush2.xpose.msra.mxu0 0.0
    %452 = vmatprep.subr.mxu0 0.0
    %453 = vmatpush2.xpose.msra.mxu0 0.0
    %454 = vmatprep.subr.mxu0 0.0
    %455 = vmatpush2.xpose.msra.mxu0 0.0
    %456 = vmatprep.mubr.f32.mxu0 0.0
    %457 = vmatmul.mubr.f32.gmra.mxu0 %v384
    %v458 = vpop.f32.mrf.mxu0
    %v459 = vadd.f32 %v76, %v458
    %v460 = vpop.f32.mrf.mxu0
    %461 = vmatprep.mubr.f32.mxu0 0.0
    %462 = vmatmul.mubr.f32.gmra.mxu0 %v386
    %v463 = vpop.f32.mrf.mxu0
    %v464 = vadd.f32 %v77, %v463
    %v465 = vpop.f32.mrf.mxu0
    %466 = vdwg.mxu0
    %v467 = vsel %vm266, %v459, -inf
    %468 = vmax.xlane.f32.xlu0 %v467
    %v469 = vpop.xlane.xlu0 %468
    %v470 = vsel %vm266, %v464, -inf
    %471 = vmax.xlane.f32.xlu0 %v470
    %v472 = vpop.xlane.xlu0 %471
    %v473 = vsub.f32 %v459, %v469
    %v474 = vsub.f32 %v464, %v472
    %v475 = vmul.f32 %v473, 1.442695
    %v476 = vpow.pop %v475
    %v477 = vmul.f32 %v474, 1.442695
    %v478 = vpow.pop %v477
    %v479 = vsel %vm266, %v476, 0.0
    %480 = vadd.xlane.f32.xlu0 %v479
    %v481 = vpop.xlane.xlu0 %480
    %v482 = vsel %vm266, %v478, 0.0
    %483 = vadd.xlane.f32.xlu0 %v482
    %v484 = vpop.xlane.xlu0 %483
    %v485 = vrcp.pop %v481
    %v486 = vrcp.pop %v484
    %v487 = vmul.f32 %v476, %v485
    %v488 = vmul.f32 %v478, %v486
    %489 = vrot.lane.b32.xlu0 %v168, 56
    %v490 = vpop.permute.xlu0 %489
    %491 = vrot.lane.b32.xlu0 %v173, 56
    %v492 = vpop.permute.xlu0 %491
    %v496 = vsel %vm266, %v487, 0
    %v499 = vsel %vm266, %v488, 0
    %501 = vmatprep.subr.mxu0 0.0
    %502 = vmatpush1.msra.mxu0 0.0
    %503 = vmatprep.subr.mxu0 0.0
    %504 = vmatpush1.msra.mxu0 0.0
    %505 = vmatprep.subr.mxu0 0.0
    %506 = vmatpush1.msra.mxu0 0.0
    %507 = vmatprep.subr.mxu0 0.0
    %508 = vmatpush1.msra.mxu0 0.0
    %509 = vmatprep.subr.mxu0 0.0
    %510 = vmatpush1.msra.mxu0 0.0
    %511 = vmatprep.subr.mxu0 0.0
    %512 = vmatpush1.msra.mxu0 0.0
    %513 = vmatprep.subr.mxu0 0.0
    %514 = vmatpush1.msra.mxu0 0.0
    %515 = vmatprep.subr.mxu0 0.0
    %516 = vmatpush1.msra.mxu0 0.0
    %517 = vmatprep.subr.mxu0 0.0
    %518 = vmatpush1.msra.mxu0 0.0
    %519 = vmatprep.subr.mxu0 0.0
    %520 = vmatpush1.msra.mxu0 0.0
    %521 = vmatprep.subr.mxu0 0.0
    %522 = vmatpush1.msra.mxu0 0.0
    %523 = vmatprep.subr.mxu0 0.0
    %524 = vmatpush1.msra.mxu0 0.0
    %525 = vmatprep.subr.mxu0 0.0
    %526 = vmatpush1.msra.mxu0 0.0
    %527 = vmatprep.subr.mxu0 0.0
    %528 = vmatpush1.msra.mxu0 0.0
    %529 = vmatprep.subr.mxu0 0.0
    %530 = vmatpush1.msra.mxu0 %v492
    %531 = vmatprep.subr.mxu0 0.0
    %532 = vmatpush1.msra.mxu0 %v490
    %533 = vmatprep.subr.mxu0 0.0
    %534 = vmatpush2.msra.mxu0 0.0
    %535 = vmatprep.subr.mxu0 0.0
    %536 = vmatpush2.msra.mxu0 0.0
    %537 = vmatprep.subr.mxu0 0.0
    %538 = vmatpush2.msra.mxu0 0.0
    %539 = vmatprep.subr.mxu0 0.0
    %540 = vmatpush2.msra.mxu0 0.0
    %541 = vmatprep.subr.mxu0 0.0
    %542 = vmatpush2.msra.mxu0 0.0
    %543 = vmatprep.subr.mxu0 0.0
    %544 = vmatpush2.msra.mxu0 0.0
    %545 = vmatprep.subr.mxu0 0.0
    %546 = vmatpush2.msra.mxu0 0.0
    %547 = vmatprep.subr.mxu0 0.0
    %548 = vmatpush2.msra.mxu0 0.0
    %549 = vmatprep.subr.mxu0 0.0
    %550 = vmatpush2.msra.mxu0 0.0
    %551 = vmatprep.subr.mxu0 0.0
    %552 = vmatpush2.msra.mxu0 0.0
    %553 = vmatprep.subr.mxu0 0.0
    %554 = vmatpush2.msra.mxu0 0.0
    %555 = vmatprep.subr.mxu0 0.0
    %556 = vmatpush2.msra.mxu0 0.0
    %557 = vmatprep.subr.mxu0 0.0
    %558 = vmatpush2.msra.mxu0 0.0
    %559 = vmatprep.subr.mxu0 0.0
    %560 = vmatpush2.msra.mxu0 0.0
    %561 = vmatprep.subr.mxu0 0.0
    %562 = vmatpush2.msra.mxu0 0.0
    %563 = vmatprep.subr.mxu0 0.0
    %564 = vmatpush2.msra.mxu0 0.0
    %565 = vmatprep.mubr.f32.mxu0 0.0
    %566 = vmatmul.mubr.f32.gmra.mxu0 %v496
    %v567 = vpop.f32.mrf.mxu0
    %v568 = vadd.f32 0.0, %v567
    %v569 = vpop.f32.mrf.mxu0
    %570 = vmatprep.mubr.f32.mxu0 0.0
    %571 = vmatmul.mubr.f32.gmra.mxu0 %v499
    %v572 = vpop.f32.mrf.mxu0
    %v573 = vadd.f32 0.0, %v572
    %v574 = vpop.f32.mrf.mxu0
    %575 = vdwg.mxu0
    %577 = vrot.lane.b32.xlu0 %v80, 32
    %v578 = vpop.permute.xlu0 %577
    %v581 = vsel %vm182, %v568, 0
    %v584 = vsel %vm182, %v573, 0
    %586 = vmatprep.subr.mxu0 0.0
    %587 = vmatpush1.msra.mxu0 0.0
    %588 = vmatprep.subr.mxu0 0.0
    %589 = vmatpush1.msra.mxu0 0.0
    %590 = vmatprep.subr.mxu0 0.0
    %591 = vmatpush1.msra.mxu0 0.0
    %592 = vmatprep.subr.mxu0 0.0
    %593 = vmatpush1.msra.mxu0 0.0
    %594 = vmatprep.subr.mxu0 0.0
    %595 = vmatpush1.msra.mxu0 0.0
    %596 = vmatprep.subr.mxu0 0.0
    %597 = vmatpush1.msra.mxu0 0.0
    %598 = vmatprep.subr.mxu0 0.0
    %599 = vmatpush1.msra.mxu0 0.0
    %600 = vmatprep.subr.mxu0 0.0
    %601 = vmatpush1.msra.mxu0 0.0
    %602 = vmatprep.subr.mxu0 0.0
    %603 = vmatpush1.msra.mxu0 0.0
    %604 = vmatprep.subr.mxu0 0.0
    %605 = vmatpush1.msra.mxu0 0.0
    %606 = vmatprep.subr.mxu0 0.0
    %607 = vmatpush1.msra.mxu0 0.0
    %608 = vmatprep.subr.mxu0 0.0
    %609 = vmatpush1.msra.mxu0 0.0
    %610 = vmatprep.subr.mxu0 0.0
    %611 = vmatpush1.msra.mxu0 0.0
    %612 = vmatprep.subr.mxu0 0.0
    %613 = vmatpush1.msra.mxu0 0.0
    %614 = vmatprep.subr.mxu0 0.0
    %615 = vmatpush1.msra.mxu0 0.0
    %616 = vmatprep.subr.mxu0 0.0
    %617 = vmatpush1.msra.mxu0 %v578
    %618 = vmatprep.subr.mxu0 0.0
    %619 = vmatpush2.msra.mxu0 0.0
    %620 = vmatprep.subr.mxu0 0.0
    %621 = vmatpush2.msra.mxu0 0.0
    %622 = vmatprep.subr.mxu0 0.0
    %623 = vmatpush2.msra.mxu0 0.0
    %624 = vmatprep.subr.mxu0 0.0
    %625 = vmatpush2.msra.mxu0 0.0
    %626 = vmatprep.subr.mxu0 0.0
    %627 = vmatpush2.msra.mxu0 0.0
    %628 = vmatprep.subr.mxu0 0.0
    %629 = vmatpush2.msra.mxu0 0.0
    %630 = vmatprep.subr.mxu0 0.0
    %631 = vmatpush2.msra.mxu0 0.0
    %632 = vmatprep.subr.mxu0 0.0
    %633 = vmatpush2.msra.mxu0 0.0
    %634 = vmatprep.subr.mxu0 0.0
    %635 = vmatpush2.msra.mxu0 0.0
    %636 = vmatprep.subr.mxu0 0.0
    %637 = vmatpush2.msra.mxu0 0.0
    %638 = vmatprep.subr.mxu0 0.0
    %639 = vmatpush2.msra.mxu0 0.0
    %640 = vmatprep.subr.mxu0 0.0
    %641 = vmatpush2.msra.mxu0 0.0
    %642 = vmatprep.subr.mxu0 0.0
    %643 = vmatpush2.msra.mxu0 0.0
    %644 = vmatprep.subr.mxu0 0.0
    %645 = vmatpush2.msra.mxu0 0.0
    %646 = vmatprep.subr.mxu0 0.0
    %647 = vmatpush2.msra.mxu0 0.0
    %648 = vmatprep.subr.mxu0 0.0
    %649 = vmatpush2.msra.mxu0 0.0
    %650 = vmatprep.mubr.f32.mxu0 0.0
    %651 = vmatmul.mubr.f32.gmra.mxu0 %v581
    %v652 = vpop.f32.mrf.mxu0
    %v653 = vadd.f32 0.0, %v652
    %v654 = vpop.f32.mrf.mxu0
    %655 = vmatprep.mubr.f32.mxu0 0.0
    %656 = vmatmul.mubr.f32.gmra.mxu0 %v584
    %v657 = vpop.f32.mrf.mxu0
    %v658 = vadd.f32 0.0, %v657
    %v659 = vpop.f32.mrf.mxu0
    %660 = vdwg.mxu0
    %662 = vrot.lane.b32.xlu0 %v78, 32
    %v663 = vpop.permute.xlu0 %662
    %v666 = vsel %vm182, %v368, 0
    %v669 = vsel %vm182, %v373, 0
    %671 = vmatprep.subr.mxu0 0.0
    %672 = vmatpush1.msra.mxu0 0.0
    %673 = vmatprep.subr.mxu0 0.0
    %674 = vmatpush1.msra.mxu0 0.0
    %675 = vmatprep.subr.mxu0 0.0
    %676 = vmatpush1.msra.mxu0 0.0
    %677 = vmatprep.subr.mxu0 0.0
    %678 = vmatpush1.msra.mxu0 0.0
    %679 = vmatprep.subr.mxu0 0.0
    %680 = vmatpush1.msra.mxu0 0.0
    %681 = vmatprep.subr.mxu0 0.0
    %682 = vmatpush1.msra.mxu0 0.0
    %683 = vmatprep.subr.mxu0 0.0
    %684 = vmatpush1.msra.mxu0 0.0
    %685 = vmatprep.subr.mxu0 0.0
    %686 = vmatpush1.msra.mxu0 0.0
    %687 = vmatprep.subr.mxu0 0.0
    %688 = vmatpush1.msra.mxu0 0.0
    %689 = vmatprep.subr.mxu0 0.0
    %690 = vmatpush1.msra.mxu0 0.0
    %691 = vmatprep.subr.mxu0 0.0
    %692 = vmatpush1.msra.mxu0 0.0
    %693 = vmatprep.subr.mxu0 0.0
    %694 = vmatpush1.msra.mxu0 0.0
    %695 = vmatprep.subr.mxu0 0.0
    %696 = vmatpush1.msra.mxu0 0.0
    %697 = vmatprep.subr.mxu0 0.0
    %698 = vmatpush1.msra.mxu0 0.0
    %699 = vmatprep.subr.mxu0 0.0
    %700 = vmatpush1.msra.mxu0 0.0
    %701 = vmatprep.subr.mxu0 0.0
    %702 = vmatpush1.msra.mxu0 %v663
    %703 = vmatprep.subr.mxu0 0.0
    %704 = vmatpush2.msra.mxu0 0.0
    %705 = vmatprep.subr.mxu0 0.0
    %706 = vmatpush2.msra.mxu0 0.0
    %707 = vmatprep.subr.mxu0 0.0
    %708 = vmatpush2.msra.mxu0 0.0
    %709 = vmatprep.subr.mxu0 0.0
    %710 = vmatpush2.msra.mxu0 0.0
    %711 = vmatprep.subr.mxu0 0.0
    %712 = vmatpush2.msra.mxu0 0.0
    %713 = vmatprep.subr.mxu0 0.0
    %714 = vmatpush2.msra.mxu0 0.0
    %715 = vmatprep.subr.mxu0 0.0
    %716 = vmatpush2.msra.mxu0 0.0
    %717 = vmatprep.subr.mxu0 0.0
    %718 = vmatpush2.msra.mxu0 0.0
    %719 = vmatprep.subr.mxu0 0.0
    %720 = vmatpush2.msra.mxu0 0.0
    %721 = vmatprep.subr.mxu0 0.0
    %722 = vmatpush2.msra.mxu0 0.0
    %723 = vmatprep.subr.mxu0 0.0
    %724 = vmatpush2.msra.mxu0 0.0
    %725 = vmatprep.subr.mxu0 0.0
    %726 = vmatpush2.msra.mxu0 0.0
    %727 = vmatprep.subr.mxu0 0.0
    %728 = vmatpush2.msra.mxu0 0.0
    %729 = vmatprep.subr.mxu0 0.0
    %730 = vmatpush2.msra.mxu0 0.0
    %731 = vmatprep.subr.mxu0 0.0
    %732 = vmatpush2.msra.mxu0 0.0
    %733 = vmatprep.subr.mxu0 0.0
    %734 = vmatpush2.msra.mxu0 0.0
    %735 = vmatprep.mubr.f32.mxu0 0.0
    %736 = vmatmul.mubr.f32.gmra.mxu0 %v666
    %v737 = vpop.f32.mrf.mxu0
    %v738 = vadd.f32 %v653, %v737
    %v739 = vpop.f32.mrf.mxu0
    %740 = vmatprep.mubr.f32.mxu0 0.0
    %741 = vmatmul.mubr.f32.gmra.mxu0 %v669
    %v742 = vpop.f32.mrf.mxu0
    %v743 = vadd.f32 %v658, %v742
    %v744 = vpop.f32.mrf.mxu0
    %745 = vdwg.mxu0
    %746 = vrot.lane.b32.xlu0 %v168, 112
    %v747 = vpop.permute.xlu0 %746
    %748 = vrot.lane.b32.xlu0 %v173, 112
    %v749 = vpop.permute.xlu0 %748
    %750 = vrot.lane.b32.xlu0 %v168, 80
    %v751 = vpop.permute.xlu0 %750
    %752 = vrot.lane.b32.xlu0 %v173, 80
    %v753 = vpop.permute.xlu0 %752
    %v754 = vsel %vm182, %v747, 0
    %v756 = vsel %vm182, %v749, 0
    %v758 = vsel %vm182, %v751, 0
    %v760 = vsel %vm182, %v753, 0
    %762 = vmatprep.subr.mxu0 0.0
    %763 = vmatpush1.xpose.msra.mxu0 0.0
    %764 = vmatprep.subr.mxu0 0.0
    %765 = vmatpush1.xpose.msra.mxu0 0.0
    %766 = vmatprep.subr.mxu0 0.0
    %767 = vmatpush1.xpose.msra.mxu0 0.0
    %768 = vmatprep.subr.mxu0 0.0
    %769 = vmatpush1.xpose.msra.mxu0 0.0
    %770 = vmatprep.subr.mxu0 0.0
    %771 = vmatpush1.xpose.msra.mxu0 0.0
    %772 = vmatprep.subr.mxu0 0.0
    %773 = vmatpush1.xpose.msra.mxu0 0.0
    %774 = vmatprep.subr.mxu0 0.0
    %775 = vmatpush1.xpose.msra.mxu0 0.0
    %776 = vmatprep.subr.mxu0 0.0
    %777 = vmatpush1.xpose.msra.mxu0 0.0
    %778 = vmatprep.subr.mxu0 0.0
    %779 = vmatpush1.xpose.msra.mxu0 0.0
    %780 = vmatprep.subr.mxu0 0.0
    %781 = vmatpush1.xpose.msra.mxu0 0.0
    %782 = vmatprep.subr.mxu0 0.0
    %783 = vmatpush1.xpose.msra.mxu0 0.0
    %784 = vmatprep.subr.mxu0 0.0
    %785 = vmatpush1.xpose.msra.mxu0 0.0
    %786 = vmatprep.subr.mxu0 0.0
    %787 = vmatpush1.xpose.msra.mxu0 0.0
    %788 = vmatprep.subr.mxu0 0.0
    %789 = vmatpush1.xpose.msra.mxu0 0.0
    %790 = vmatprep.subr.mxu0 0.0
    %791 = vmatpush1.xpose.msra.mxu0 %v760
    %792 = vmatprep.subr.mxu0 0.0
    %793 = vmatpush1.xpose.msra.mxu0 %v758
    %794 = vmatprep.subr.mxu0 0.0
    %795 = vmatpush2.xpose.msra.mxu0 0.0
    %796 = vmatprep.subr.mxu0 0.0
    %797 = vmatpush2.xpose.msra.mxu0 0.0
    %798 = vmatprep.subr.mxu0 0.0
    %799 = vmatpush2.xpose.msra.mxu0 0.0
    %800 = vmatprep.subr.mxu0 0.0
    %801 = vmatpush2.xpose.msra.mxu0 0.0
    %802 = vmatprep.subr.mxu0 0.0
    %803 = vmatpush2.xpose.msra.mxu0 0.0
    %804 = vmatprep.subr.mxu0 0.0
    %805 = vmatpush2.xpose.msra.mxu0 0.0
    %806 = vmatprep.subr.mxu0 0.0
    %807 = vmatpush2.xpose.msra.mxu0 0.0
    %808 = vmatprep.subr.mxu0 0.0
    %809 = vmatpush2.xpose.msra.mxu0 0.0
    %810 = vmatprep.subr.mxu0 0.0
    %811 = vmatpush2.xpose.msra.mxu0 0.0
    %812 = vmatprep.subr.mxu0 0.0
    %813 = vmatpush2.xpose.msra.mxu0 0.0
    %814 = vmatprep.subr.mxu0 0.0
    %815 = vmatpush2.xpose.msra.mxu0 0.0
    %816 = vmatprep.subr.mxu0 0.0
    %817 = vmatpush2.xpose.msra.mxu0 0.0
    %818 = vmatprep.subr.mxu0 0.0
    %819 = vmatpush2.xpose.msra.mxu0 0.0
    %820 = vmatprep.subr.mxu0 0.0
    %821 = vmatpush2.xpose.msra.mxu0 0.0
    %822 = vmatprep.subr.mxu0 0.0
    %823 = vmatpush2.xpose.msra.mxu0 0.0
    %824 = vmatprep.subr.mxu0 0.0
    %825 = vmatpush2.xpose.msra.mxu0 0.0
    %826 = vmatprep.mubr.f32.mxu0 0.0
    %827 = vmatmul.mubr.f32.gmra.mxu0 %v754
    %v828 = vpop.f32.mrf.mxu0
    %v829 = vadd.f32 %v76, %v828
    %v830 = vpop.f32.mrf.mxu0
    %831 = vmatprep.mubr.f32.mxu0 0.0
    %832 = vmatmul.mubr.f32.gmra.mxu0 %v756
    %v833 = vpop.f32.mrf.mxu0
    %v834 = vadd.f32 %v77, %v833
    %v835 = vpop.f32.mrf.mxu0
    %836 = vdwg.mxu0
    %v837 = vsel %vm266, %v829, -inf
    %838 = vmax.xlane.f32.xlu0 %v837
    %v839 = vpop.xlane.xlu0 %838
    %v840 = vsel %vm266, %v834, -inf
    %841 = vmax.xlane.f32.xlu0 %v840
    %v842 = vpop.xlane.xlu0 %841
    %v843 = vsub.f32 %v829, %v839
    %v844 = vsub.f32 %v834, %v842
    %v845 = vmul.f32 %v843, 1.442695
    %v846 = vpow.pop %v845
    %v847 = vmul.f32 %v844, 1.442695
    %v848 = vpow.pop %v847
    %v849 = vsel %vm266, %v846, 0.0
    %850 = vadd.xlane.f32.xlu0 %v849
    %v851 = vpop.xlane.xlu0 %850
    %v852 = vsel %vm266, %v848, 0.0
    %853 = vadd.xlane.f32.xlu0 %v852
    %v854 = vpop.xlane.xlu0 %853
    %v855 = vrcp.pop %v851
    %v856 = vrcp.pop %v854
    %v857 = vmul.f32 %v846, %v855
    %v858 = vmul.f32 %v848, %v856
    %859 = vrot.lane.b32.xlu0 %v168, 48
    %v860 = vpop.permute.xlu0 %859
    %861 = vrot.lane.b32.xlu0 %v173, 48
    %v862 = vpop.permute.xlu0 %861
    %v866 = vsel %vm266, %v857, 0
    %v869 = vsel %vm266, %v858, 0
    %871 = vmatprep.subr.mxu0 0.0
    %872 = vmatpush1.msra.mxu0 0.0
    %873 = vmatprep.subr.mxu0 0.0
    %874 = vmatpush1.msra.mxu0 0.0
    %875 = vmatprep.subr.mxu0 0.0
    %876 = vmatpush1.msra.mxu0 0.0
    %877 = vmatprep.subr.mxu0 0.0
    %878 = vmatpush1.msra.mxu0 0.0
    %879 = vmatprep.subr.mxu0 0.0
    %880 = vmatpush1.msra.mxu0 0.0
    %881 = vmatprep.subr.mxu0 0.0
    %882 = vmatpush1.msra.mxu0 0.0
    %883 = vmatprep.subr.mxu0 0.0
    %884 = vmatpush1.msra.mxu0 0.0
    %885 = vmatprep.subr.mxu0 0.0
    %886 = vmatpush1.msra.mxu0 0.0
    %887 = vmatprep.subr.mxu0 0.0
    %888 = vmatpush1.msra.mxu0 0.0
    %889 = vmatprep.subr.mxu0 0.0
    %890 = vmatpush1.msra.mxu0 0.0
    %891 = vmatprep.subr.mxu0 0.0
    %892 = vmatpush1.msra.mxu0 0.0
    %893 = vmatprep.subr.mxu0 0.0
    %894 = vmatpush1.msra.mxu0 0.0
    %895 = vmatprep.subr.mxu0 0.0
    %896 = vmatpush1.msra.mxu0 0.0
    %897 = vmatprep.subr.mxu0 0.0
    %898 = vmatpush1.msra.mxu0 0.0
    %899 = vmatprep.subr.mxu0 0.0
    %900 = vmatpush1.msra.mxu0 %v862
    %901 = vmatprep.subr.mxu0 0.0
    %902 = vmatpush1.msra.mxu0 %v860
    %903 = vmatprep.subr.mxu0 0.0
    %904 = vmatpush2.msra.mxu0 0.0
    %905 = vmatprep.subr.mxu0 0.0
    %906 = vmatpush2.msra.mxu0 0.0
    %907 = vmatprep.subr.mxu0 0.0
    %908 = vmatpush2.msra.mxu0 0.0
    %909 = vmatprep.subr.mxu0 0.0
    %910 = vmatpush2.msra.mxu0 0.0
    %911 = vmatprep.subr.mxu0 0.0
    %912 = vmatpush2.msra.mxu0 0.0
    %913 = vmatprep.subr.mxu0 0.0
    %914 = vmatpush2.msra.mxu0 0.0
    %915 = vmatprep.subr.mxu0 0.0
    %916 = vmatpush2.msra.mxu0 0.0
    %917 = vmatprep.subr.mxu0 0.0
    %918 = vmatpush2.msra.mxu0 0.0
    %919 = vmatprep.subr.mxu0 0.0
    %920 = vmatpush2.msra.mxu0 0.0
    %921 = vmatprep.subr.mxu0 0.0
    %922 = vmatpush2.msra.mxu0 0.0
    %923 = vmatprep.subr.mxu0 0.0
    %924 = vmatpush2.msra.mxu0 0.0
    %925 = vmatprep.subr.mxu0 0.0
    %926 = vmatpush2.msra.mxu0 0.0
    %927 = vmatprep.subr.mxu0 0.0
    %928 = vmatpush2.msra.mxu0 0.0
    %929 = vmatprep.subr.mxu0 0.0
    %930 = vmatpush2.msra.mxu0 0.0
    %931 = vmatprep.subr.mxu0 0.0
    %932 = vmatpush2.msra.mxu0 0.0
    %933 = vmatprep.subr.mxu0 0.0
    %934 = vmatpush2.msra.mxu0 0.0
    %935 = vmatprep.mubr.f32.mxu0 0.0
    %936 = vmatmul.mubr.f32.gmra.mxu0 %v866
    %v937 = vpop.f32.mrf.mxu0
    %v938 = vadd.f32 0.0, %v937
    %v939 = vpop.f32.mrf.mxu0
    %940 = vmatprep.mubr.f32.mxu0 0.0
    %941 = vmatmul.mubr.f32.gmra.mxu0 %v869
    %v942 = vpop.f32.mrf.mxu0
    %v943 = vadd.f32 0.0, %v942
    %v944 = vpop.f32.mrf.mxu0
    %945 = vdwg.mxu0
    %947 = vrot.lane.b32.xlu0 %v82, 32
    %v948 = vpop.permute.xlu0 %947
    %v951 = vsel %vm182, %v938, 0
    %v954 = vsel %vm182, %v943, 0
    %956 = vmatprep.subr.mxu0 0.0
    %957 = vmatpush1.msra.mxu0 0.0
    %958 = vmatprep.subr.mxu0 0.0
    %959 = vmatpush1.msra.mxu0 0.0
    %960 = vmatprep.subr.mxu0 0.0
    %961 = vmatpush1.msra.mxu0 0.0
    %962 = vmatprep.subr.mxu0 0.0
    %963 = vmatpush1.msra.mxu0 0.0
    %964 = vmatprep.subr.mxu0 0.0
    %965 = vmatpush1.msra.mxu0 0.0
    %966 = vmatprep.subr.mxu0 0.0
    %967 = vmatpush1.msra.mxu0 0.0
    %968 = vmatprep.subr.mxu0 0.0
    %969 = vmatpush1.msra.mxu0 0.0
    %970 = vmatprep.subr.mxu0 0.0
    %971 = vmatpush1.msra.mxu0 0.0
    %972 = vmatprep.subr.mxu0 0.0
    %973 = vmatpush1.msra.mxu0 0.0
    %974 = vmatprep.subr.mxu0 0.0
    %975 = vmatpush1.msra.mxu0 0.0
    %976 = vmatprep.subr.mxu0 0.0
    %977 = vmatpush1.msra.mxu0 0.0
    %978 = vmatprep.subr.mxu0 0.0
    %979 = vmatpush1.msra.mxu0 0.0
    %980 = vmatprep.subr.mxu0 0.0
    %981 = vmatpush1.msra.mxu0 0.0
    %982 = vmatprep.subr.mxu0 0.0
    %983 = vmatpush1.msra.mxu0 0.0
    %984 = vmatprep.subr.mxu0 0.0
    %985 = vmatpush1.msra.mxu0 0.0
    %986 = vmatprep.subr.mxu0 0.0
    %987 = vmatpush1.msra.mxu0 %v948
    %988 = vmatprep.subr.mxu0 0.0
    %989 = vmatpush2.msra.mxu0 0.0
    %990 = vmatprep.subr.mxu0 0.0
    %991 = vmatpush2.msra.mxu0 0.0
    %992 = vmatprep.subr.mxu0 0.0
    %993 = vmatpush2.msra.mxu0 0.0
    %994 = vmatprep.subr.mxu0 0.0
    %995 = vmatpush2.msra.mxu0 0.0
    %996 = vmatprep.subr.mxu0 0.0
    %997 = vmatpush2.msra.mxu0 0.0
    %998 = vmatprep.subr.mxu0 0.0
    %999 = vmatpush2.msra.mxu0 0.0
    %1000 = vmatprep.subr.mxu0 0.0
    %1001 = vmatpush2.msra.mxu0 0.0
    %1002 = vmatprep.subr.mxu0 0.0
    %1003 = vmatpush2.msra.mxu0 0.0
    %1004 = vmatprep.subr.mxu0 0.0
    %1005 = vmatpush2.msra.mxu0 0.0
    %1006 = vmatprep.subr.mxu0 0.0
    %1007 = vmatpush2.msra.mxu0 0.0
    %1008 = vmatprep.subr.mxu0 0.0
    %1009 = vmatpush2.msra.mxu0 0.0
    %1010 = vmatprep.subr.mxu0 0.0
    %1011 = vmatpush2.msra.mxu0 0.0
    %1012 = vmatprep.subr.mxu0 0.0
    %1013 = vmatpush2.msra.mxu0 0.0
    %1014 = vmatprep.subr.mxu0 0.0
    %1015 = vmatpush2.msra.mxu0 0.0
    %1016 = vmatprep.subr.mxu0 0.0
    %1017 = vmatpush2.msra.mxu0 0.0
    %1018 = vmatprep.subr.mxu0 0.0
    %1019 = vmatpush2.msra.mxu0 0.0
    %1020 = vmatprep.mubr.f32.mxu0 0.0
    %1021 = vmatmul.mubr.f32.gmra.mxu0 %v951
    %v1022 = vpop.f32.mrf.mxu0
    %v1023 = vadd.f32 0.0, %v1022
    %v1024 = vpop.f32.mrf.mxu0
    %1025 = vmatprep.mubr.f32.mxu0 0.0
    %1026 = vmatmul.mubr.f32.gmra.mxu0 %v954
    %v1027 = vpop.f32.mrf.mxu0
    %v1028 = vadd.f32 0.0, %v1027
    %v1029 = vpop.f32.mrf.mxu0
    %1030 = vdwg.mxu0
    %v1031 = vadd.f32 %v738, %v1023
    %v1032 = vadd.f32 %v743, %v1028
    %1033 = vrot.lane.b32.xlu0 %v168, 104
    %v1034 = vpop.permute.xlu0 %1033
    %1035 = vrot.lane.b32.xlu0 %v173, 104
    %v1036 = vpop.permute.xlu0 %1035
    %1037 = vrot.lane.b32.xlu0 %v168, 72
    %v1038 = vpop.permute.xlu0 %1037
    %1039 = vrot.lane.b32.xlu0 %v173, 72
    %v1040 = vpop.permute.xlu0 %1039
    %v1041 = vsel %vm182, %v1034, 0
    %v1043 = vsel %vm182, %v1036, 0
    %v1045 = vsel %vm182, %v1038, 0
    %v1047 = vsel %vm182, %v1040, 0
    %1049 = vmatprep.subr.mxu0 0.0
    %1050 = vmatpush1.xpose.msra.mxu0 0.0
    %1051 = vmatprep.subr.mxu0 0.0
    %1052 = vmatpush1.xpose.msra.mxu0 0.0
    %1053 = vmatprep.subr.mxu0 0.0
    %1054 = vmatpush1.xpose.msra.mxu0 0.0
    %1055 = vmatprep.subr.mxu0 0.0
    %1056 = vmatpush1.xpose.msra.mxu0 0.0
    %1057 = vmatprep.subr.mxu0 0.0
    %1058 = vmatpush1.xpose.msra.mxu0 0.0
    %1059 = vmatprep.subr.mxu0 0.0
    %1060 = vmatpush1.xpose.msra.mxu0 0.0
    %1061 = vmatprep.subr.mxu0 0.0
    %1062 = vmatpush1.xpose.msra.mxu0 0.0
    %1063 = vmatprep.subr.mxu0 0.0
    %1064 = vmatpush1.xpose.msra.mxu0 0.0
    %1065 = vmatprep.subr.mxu0 0.0
    %1066 = vmatpush1.xpose.msra.mxu0 0.0
    %1067 = vmatprep.subr.mxu0 0.0
    %1068 = vmatpush1.xpose.msra.mxu0 0.0
    %1069 = vmatprep.subr.mxu0 0.0
    %1070 = vmatpush1.xpose.msra.mxu0 0.0
    %1071 = vmatprep.subr.mxu0 0.0
    %1072 = vmatpush1.xpose.msra.mxu0 0.0
    %1073 = vmatprep.subr.mxu0 0.0
    %1074 = vmatpush1.xpose.msra.mxu0 0.0
    %1075 = vmatprep.subr.mxu0 0.0
    %1076 = vmatpush1.xpose.msra.mxu0 0.0
    %1077 = vmatprep.subr.mxu0 0.0
    %1078 = vmatpush1.xpose.msra.mxu0 %v1047
    %1079 = vmatprep.subr.mxu0 0.0
    %1080 = vmatpush1.xpose.msra.mxu0 %v1045
    %1081 = vmatprep.subr.mxu0 0.0
    %1082 = vmatpush2.xpose.msra.mxu0 0.0
    %1083 = vmatprep.subr.mxu0 0.0
    %1084 = vmatpush2.xpose.msra.mxu0 0.0
    %1085 = vmatprep.subr.mxu0 0.0
    %1086 = vmatpush2.xpose.msra.mxu0 0.0
    %1087 = vmatprep.subr.mxu0 0.0
    %1088 = vmatpush2.xpose.msra.mxu0 0.0
    %1089 = vmatprep.subr.mxu0 0.0
    %1090 = vmatpush2.xpose.msra.mxu0 0.0
    %1091 = vmatprep.subr.mxu0 0.0
    %1092 = vmatpush2.xpose.msra.mxu0 0.0
    %1093 = vmatprep.subr.mxu0 0.0
    %1094 = vmatpush2.xpose.msra.mxu0 0.0
    %1095 = vmatprep.subr.mxu0 0.0
    %1096 = vmatpush2.xpose.msra.mxu0 0.0
    %1097 = vmatprep.subr.mxu0 0.0
    %1098 = vmatpush2.xpose.msra.mxu0 0.0
    %1099 = vmatprep.subr.mxu0 0.0
    %1100 = vmatpush2.xpose.msra.mxu0 0.0
    %1101 = vmatprep.subr.mxu0 0.0
    %1102 = vmatpush2.xpose.msra.mxu0 0.0
    %1103 = vmatprep.subr.mxu0 0.0
    %1104 = vmatpush2.xpose.msra.mxu0 0.0
    %1105 = vmatprep.subr.mxu0 0.0
    %1106 = vmatpush2.xpose.msra.mxu0 0.0
    %1107 = vmatprep.subr.mxu0 0.0
    %1108 = vmatpush2.xpose.msra.mxu0 0.0
    %1109 = vmatprep.subr.mxu0 0.0
    %1110 = vmatpush2.xpose.msra.mxu0 0.0
    %1111 = vmatprep.subr.mxu0 0.0
    %1112 = vmatpush2.xpose.msra.mxu0 0.0
    %1113 = vmatprep.mubr.f32.mxu0 0.0
    %1114 = vmatmul.mubr.f32.gmra.mxu0 %v1041
    %v1115 = vpop.f32.mrf.mxu0
    %v1116 = vadd.f32 %v76, %v1115
    %v1117 = vpop.f32.mrf.mxu0
    %1118 = vmatprep.mubr.f32.mxu0 0.0
    %1119 = vmatmul.mubr.f32.gmra.mxu0 %v1043
    %v1120 = vpop.f32.mrf.mxu0
    %v1121 = vadd.f32 %v77, %v1120
    %v1122 = vpop.f32.mrf.mxu0
    %1123 = vdwg.mxu0
    %v1124 = vsel %vm266, %v1116, -inf
    %1125 = vmax.xlane.f32.xlu0 %v1124
    %v1126 = vpop.xlane.xlu0 %1125
    %v1127 = vsel %vm266, %v1121, -inf
    %1128 = vmax.xlane.f32.xlu0 %v1127
    %v1129 = vpop.xlane.xlu0 %1128
    %v1130 = vsub.f32 %v1116, %v1126
    %v1131 = vsub.f32 %v1121, %v1129
    %v1132 = vmul.f32 %v1130, 1.442695
    %v1133 = vpow.pop %v1132
    %v1134 = vmul.f32 %v1131, 1.442695
    %v1135 = vpow.pop %v1134
    %v1136 = vsel %vm266, %v1133, 0.0
    %1137 = vadd.xlane.f32.xlu0 %v1136
    %v1138 = vpop.xlane.xlu0 %1137
    %v1139 = vsel %vm266, %v1135, 0.0
    %1140 = vadd.xlane.f32.xlu0 %v1139
    %v1141 = vpop.xlane.xlu0 %1140
    %v1142 = vrcp.pop %v1138
    %v1143 = vrcp.pop %v1141
    %v1144 = vmul.f32 %v1133, %v1142
    %v1145 = vmul.f32 %v1135, %v1143
    %1146 = vrot.lane.b32.xlu0 %v168, 40
    %v1147 = vpop.permute.xlu0 %1146
    %1148 = vrot.lane.b32.xlu0 %v173, 40
    %v1149 = vpop.permute.xlu0 %1148
    %v1153 = vsel %vm266, %v1144, 0
    %v1156 = vsel %vm266, %v1145, 0
    %1158 = vmatprep.subr.mxu0 0.0
    %1159 = vmatpush1.msra.mxu0 0.0
    %1160 = vmatprep.subr.mxu0 0.0
    %1161 = vmatpush1.msra.mxu0 0.0
    %1162 = vmatprep.subr.mxu0 0.0
    %1163 = vmatpush1.msra.mxu0 0.0
    %1164 = vmatprep.subr.mxu0 0.0
    %1165 = vmatpush1.msra.mxu0 0.0
    %1166 = vmatprep.subr.mxu0 0.0
    %1167 = vmatpush1.msra.mxu0 0.0
    %1168 = vmatprep.subr.mxu0 0.0
    %1169 = vmatpush1.msra.mxu0 0.0
    %1170 = vmatprep.subr.mxu0 0.0
    %1171 = vmatpush1.msra.mxu0 0.0
    %1172 = vmatprep.subr.mxu0 0.0
    %1173 = vmatpush1.msra.mxu0 0.0
    %1174 = vmatprep.subr.mxu0 0.0
    %1175 = vmatpush1.msra.mxu0 0.0
    %1176 = vmatprep.subr.mxu0 0.0
    %1177 = vmatpush1.msra.mxu0 0.0
    %1178 = vmatprep.subr.mxu0 0.0
    %1179 = vmatpush1.msra.mxu0 0.0
    %1180 = vmatprep.subr.mxu0 0.0
    %1181 = vmatpush1.msra.mxu0 0.0
    %1182 = vmatprep.subr.mxu0 0.0
    %1183 = vmatpush1.msra.mxu0 0.0
    %1184 = vmatprep.subr.mxu0 0.0
    %1185 = vmatpush1.msra.mxu0 0.0
    %1186 = vmatprep.subr.mxu0 0.0
    %1187 = vmatpush1.msra.mxu0 %v1149
    %1188 = vmatprep.subr.mxu0 0.0
    %1189 = vmatpush1.msra.mxu0 %v1147
    %1190 = vmatprep.subr.mxu0 0.0
    %1191 = vmatpush2.msra.mxu0 0.0
    %1192 = vmatprep.subr.mxu0 0.0
    %1193 = vmatpush2.msra.mxu0 0.0
    %1194 = vmatprep.subr.mxu0 0.0
    %1195 = vmatpush2.msra.mxu0 0.0
    %1196 = vmatprep.subr.mxu0 0.0
    %1197 = vmatpush2.msra.mxu0 0.0
    %1198 = vmatprep.subr.mxu0 0.0
    %1199 = vmatpush2.msra.mxu0 0.0
    %1200 = vmatprep.subr.mxu0 0.0
    %1201 = vmatpush2.msra.mxu0 0.0
    %1202 = vmatprep.subr.mxu0 0.0
    %1203 = vmatpush2.msra.mxu0 0.0
    %1204 = vmatprep.subr.mxu0 0.0
    %1205 = vmatpush2.msra.mxu0 0.0
    %1206 = vmatprep.subr.mxu0 0.0
    %1207 = vmatpush2.msra.mxu0 0.0
    %1208 = vmatprep.subr.mxu0 0.0
    %1209 = vmatpush2.msra.mxu0 0.0
    %1210 = vmatprep.subr.mxu0 0.0
    %1211 = vmatpush2.msra.mxu0 0.0
    %1212 = vmatprep.subr.mxu0 0.0
    %1213 = vmatpush2.msra.mxu0 0.0
    %1214 = vmatprep.subr.mxu0 0.0
    %1215 = vmatpush2.msra.mxu0 0.0
    %1216 = vmatprep.subr.mxu0 0.0
    %1217 = vmatpush2.msra.mxu0 0.0
    %1218 = vmatprep.subr.mxu0 0.0
    %1219 = vmatpush2.msra.mxu0 0.0
    %1220 = vmatprep.subr.mxu0 0.0
    %1221 = vmatpush2.msra.mxu0 0.0
    %1222 = vmatprep.mubr.f32.mxu0 0.0
    %1223 = vmatmul.mubr.f32.gmra.mxu0 %v1153
    %v1224 = vpop.f32.mrf.mxu0
    %v1225 = vadd.f32 0.0, %v1224
    %v1226 = vpop.f32.mrf.mxu0
    %1227 = vmatprep.mubr.f32.mxu0 0.0
    %1228 = vmatmul.mubr.f32.gmra.mxu0 %v1156
    %v1229 = vpop.f32.mrf.mxu0
    %v1230 = vadd.f32 0.0, %v1229
    %v1231 = vpop.f32.mrf.mxu0
    %1232 = vdwg.mxu0
    %1234 = vrot.lane.b32.xlu0 %v84, 32
    %v1235 = vpop.permute.xlu0 %1234
    %v1238 = vsel %vm182, %v1225, 0
    %v1241 = vsel %vm182, %v1230, 0
    %1243 = vmatprep.subr.mxu0 0.0
    %1244 = vmatpush1.msra.mxu0 0.0
    %1245 = vmatprep.subr.mxu0 0.0
    %1246 = vmatpush1.msra.mxu0 0.0
    %1247 = vmatprep.subr.mxu0 0.0
    %1248 = vmatpush1.msra.mxu0 0.0
    %1249 = vmatprep.subr.mxu0 0.0
    %1250 = vmatpush1.msra.mxu0 0.0
    %1251 = vmatprep.subr.mxu0 0.0
    %1252 = vmatpush1.msra.mxu0 0.0
    %1253 = vmatprep.subr.mxu0 0.0
    %1254 = vmatpush1.msra.mxu0 0.0
    %1255 = vmatprep.subr.mxu0 0.0
    %1256 = vmatpush1.msra.mxu0 0.0
    %1257 = vmatprep.subr.mxu0 0.0
    %1258 = vmatpush1.msra.mxu0 0.0
    %1259 = vmatprep.subr.mxu0 0.0
    %1260 = vmatpush1.msra.mxu0 0.0
    %1261 = vmatprep.subr.mxu0 0.0
    %1262 = vmatpush1.msra.mxu0 0.0
    %1263 = vmatprep.subr.mxu0 0.0
    %1264 = vmatpush1.msra.mxu0 0.0
    %1265 = vmatprep.subr.mxu0 0.0
    %1266 = vmatpush1.msra.mxu0 0.0
    %1267 = vmatprep.subr.mxu0 0.0
    %1268 = vmatpush1.msra.mxu0 0.0
    %1269 = vmatprep.subr.mxu0 0.0
    %1270 = vmatpush1.msra.mxu0 0.0
    %1271 = vmatprep.subr.mxu0 0.0
    %1272 = vmatpush1.msra.mxu0 0.0
    %1273 = vmatprep.subr.mxu0 0.0
    %1274 = vmatpush1.msra.mxu0 %v1235
    %1275 = vmatprep.subr.mxu0 0.0
    %1276 = vmatpush2.msra.mxu0 0.0
    %1277 = vmatprep.subr.mxu0 0.0
    %1278 = vmatpush2.msra.mxu0 0.0
    %1279 = vmatprep.subr.mxu0 0.0
    %1280 = vmatpush2.msra.mxu0 0.0
    %1281 = vmatprep.subr.mxu0 0.0
    %1282 = vmatpush2.msra.mxu0 0.0
    %1283 = vmatprep.subr.mxu0 0.0
    %1284 = vmatpush2.msra.mxu0 0.0
    %1285 = vmatprep.subr.mxu0 0.0
    %1286 = vmatpush2.msra.mxu0 0.0
    %1287 = vmatprep.subr.mxu0 0.0
    %1288 = vmatpush2.msra.mxu0 0.0
    %1289 = vmatprep.subr.mxu0 0.0
    %1290 = vmatpush2.msra.mxu0 0.0
    %1291 = vmatprep.subr.mxu0 0.0
    %1292 = vmatpush2.msra.mxu0 0.0
    %1293 = vmatprep.subr.mxu0 0.0
    %1294 = vmatpush2.msra.mxu0 0.0
    %1295 = vmatprep.subr.mxu0 0.0
    %1296 = vmatpush2.msra.mxu0 0.0
    %1297 = vmatprep.subr.mxu0 0.0
    %1298 = vmatpush2.msra.mxu0 0.0
    %1299 = vmatprep.subr.mxu0 0.0
    %1300 = vmatpush2.msra.mxu0 0.0
    %1301 = vmatprep.subr.mxu0 0.0
    %1302 = vmatpush2.msra.mxu0 0.0
    %1303 = vmatprep.subr.mxu0 0.0
    %1304 = vmatpush2.msra.mxu0 0.0
    %1305 = vmatprep.subr.mxu0 0.0
    %1306 = vmatpush2.msra.mxu0 0.0
    %1307 = vmatprep.mubr.f32.mxu0 0.0
    %1308 = vmatmul.mubr.f32.gmra.mxu0 %v1238
    %v1309 = vpop.f32.mrf.mxu0
    %v1310 = vadd.f32 0.0, %v1309
    %v1311 = vpop.f32.mrf.mxu0
    %1312 = vmatprep.mubr.f32.mxu0 0.0
    %1313 = vmatmul.mubr.f32.gmra.mxu0 %v1241
    %v1314 = vpop.f32.mrf.mxu0
    %v1315 = vadd.f32 0.0, %v1314
    %v1316 = vpop.f32.mrf.mxu0
    %1317 = vdwg.mxu0
    %v1318 = vadd.f32 %v1031, %v1310
    %v1319 = vadd.f32 %v1032, %v1315
    %v1320 = vlaneseq
    %v1321 = vshrl.u32 %v1320, 7
    %v1322 = vsub.s32 0, %v1321
    %v1323 = vrot.slane %v86, %v1322
    %v1324 = vadd.f32 %v1318, %v1323
    %v1325 = vadd.f32 %v1319, %v1323
    %v1326 = vadd.f32 %v74, %v1324
    %v1327 = vadd.f32 %v75, %v1325
    %v1328 = vsel %vm94, %v1326, 0.0
    %1329 = vadd.xlane.f32.xlu0 %v1328
    %v1330 = vpop.xlane.xlu0 %1329
    %v1331 = vsel %vm94, %v1327, 0.0
    %1332 = vadd.xlane.f32.xlu0 %v1331
    %v1333 = vpop.xlane.xlu0 %1332
    %v1334 = vrcp.pop 32.0
    %v1335 = vmul.f32 %v1330, %v1334
    %v1336 = vmul.f32 %v1333, %v1334
    %v1337 = vsub.f32 %v1326, %v1335
    %v1338 = vsub.f32 %v1327, %v1336
    %v1339 = vmul.f32 %v1337, %v1337
    %v1340 = vmul.f32 %v1338, %v1338
    %v1341 = vsel %vm94, %v1339, 0.0
    %1342 = vadd.xlane.f32.xlu0 %v1341
    %v1343 = vpop.xlane.xlu0 %1342
    %v1344 = vsel %vm94, %v1340, 0.0
    %1345 = vadd.xlane.f32.xlu0 %v1344
    %v1346 = vpop.xlane.xlu0 %1345
    %v1347 = vmul.f32 %v1343, %v1334
    %v1348 = vmul.f32 %v1346, %v1334
    %v1349 = vadd.f32 %v1347, 1e-05
    %v1350 = vadd.f32 %v1348, 1e-05
    %v1351 = vrsqrt.pop %v1349
    %v1352 = vrsqrt.pop %v1350
    %v1353 = vmul.f32 %v1337, %v1351
    %v1354 = vmul.f32 %v1338, %v1352
    %v1355 = vlaneseq
    %v1356 = vshrl.u32 %v1355, 7
    %v1357 = vsub.s32 3, %v1356
    %v1358 = vrot.slane %v86, %v1357
    %v1359 = vmul.f32 %v1353, %v1358
    %v1360 = vmul.f32 %v1354, %v1358
    %v1361 = vlaneseq
    %v1362 = vshrl.u32 %v1361, 7
    %v1363 = vsub.s32 4, %v1362
    %v1364 = vrot.slane %v86, %v1363
    %v1365 = vadd.f32 %v1359, %v1364
    %v1366 = vadd.f32 %v1360, %v1364
    %v1367 = vlaneseq
    %v1368 = vshrl.u32 %v1367, 7
    %v1369 = vsub.s32 1, %v1368
    %v1370 = vrot.slane %v86, %v1369
    %v1372 = vsel %vm94, %v1324, 0
    %v1375 = vsel %vm94, %v1325, 0
    %1377 = vmatprep.subr.mxu0 0.0
    %1378 = vmatpush1.msra.mxu0 0.0
    %1379 = vmatprep.subr.mxu0 0.0
    %1380 = vmatpush1.msra.mxu0 0.0
    %1381 = vmatprep.subr.mxu0 0.0
    %1382 = vmatpush1.msra.mxu0 0.0
    %1383 = vmatprep.subr.mxu0 0.0
    %1384 = vmatpush1.msra.mxu0 0.0
    %1385 = vmatprep.subr.mxu0 0.0
    %1386 = vmatpush1.msra.mxu0 0.0
    %1387 = vmatprep.subr.mxu0 0.0
    %1388 = vmatpush1.msra.mxu0 0.0
    %1389 = vmatprep.subr.mxu0 0.0
    %1390 = vmatpush1.msra.mxu0 0.0
    %1391 = vmatprep.subr.mxu0 0.0
    %1392 = vmatpush1.msra.mxu0 0.0
    %1393 = vmatprep.subr.mxu0 0.0
    %1394 = vmatpush1.msra.mxu0 0.0
    %1395 = vmatprep.subr.mxu0 0.0
    %1396 = vmatpush1.msra.mxu0 0.0
    %1397 = vmatprep.subr.mxu0 0.0
    %1398 = vmatpush1.msra.mxu0 0.0
    %1399 = vmatprep.subr.mxu0 0.0
    %1400 = vmatpush1.msra.mxu0 0.0
    %1401 = vmatprep.subr.mxu0 0.0
    %1402 = vmatpush1.msra.mxu0 %v85
    %1403 = vmatprep.subr.mxu0 0.0
    %1404 = vmatpush1.msra.mxu0 %v83
    %1405 = vmatprep.subr.mxu0 0.0
    %1406 = vmatpush1.msra.mxu0 %v81
    %1407 = vmatprep.subr.mxu0 0.0
    %1408 = vmatpush1.msra.mxu0 %v79
    %1409 = vmatprep.subr.mxu0 0.0
    %1410 = vmatpush2.msra.mxu0 0.0
    %1411 = vmatprep.subr.mxu0 0.0
    %1412 = vmatpush2.msra.mxu0 0.0
    %1413 = vmatprep.subr.mxu0 0.0
    %1414 = vmatpush2.msra.mxu0 0.0
    %1415 = vmatprep.subr.mxu0 0.0
    %1416 = vmatpush2.msra.mxu0 0.0
    %1417 = vmatprep.subr.mxu0 0.0
    %1418 = vmatpush2.msra.mxu0 0.0
    %1419 = vmatprep.subr.mxu0 0.0
    %1420 = vmatpush2.msra.mxu0 0.0
    %1421 = vmatprep.subr.mxu0 0.0
    %1422 = vmatpush2.msra.mxu0 0.0
    %1423 = vmatprep.subr.mxu0 0.0
    %1424 = vmatpush2.msra.mxu0 0.0
    %1425 = vmatprep.subr.mxu0 0.0
    %1426 = vmatpush2.msra.mxu0 0.0
    %1427 = vmatprep.subr.mxu0 0.0
    %1428 = vmatpush2.msra.mxu0 0.0
    %1429 = vmatprep.subr.mxu0 0.0
    %1430 = vmatpush2.msra.mxu0 0.0
    %1431 = vmatprep.subr.mxu0 0.0
    %1432 = vmatpush2.msra.mxu0 0.0
    %1433 = vmatprep.subr.mxu0 0.0
    %1434 = vmatpush2.msra.mxu0 0.0
    %1435 = vmatprep.subr.mxu0 0.0
    %1436 = vmatpush2.msra.mxu0 0.0
    %1437 = vmatprep.subr.mxu0 0.0
    %1438 = vmatpush2.msra.mxu0 0.0
    %1439 = vmatprep.subr.mxu0 0.0
    %1440 = vmatpush2.msra.mxu0 0.0
    %1441 = vmatprep.mubr.f32.mxu0 0.0
    %1442 = vmatmul.mubr.f32.gmra.mxu0 %v1372
    %v1443 = vpop.f32.mrf.mxu0
    %v1444 = vadd.f32 %v1370, %v1443
    %v1445 = vpop.f32.mrf.mxu0
    %1446 = vmatprep.mubr.f32.mxu0 0.0
    %1447 = vmatmul.mubr.f32.gmra.mxu0 %v1375
    %v1448 = vpop.f32.mrf.mxu0
    %v1449 = vadd.f32 %v1370, %v1448
    %v1450 = vpop.f32.mrf.mxu0
    %1451 = vdwg.mxu0
    %v1452 = vmax.f32 %v1444, 0.0
    %v1453 = vmax.f32 %v1449, 0.0
    %v1454 = vlaneseq
    %v1455 = vshrl.u32 %v1454, 7
    %v1456 = vsub.s32 2, %v1455
    %v1457 = vrot.slane %v86, %v1456
    %1462 = vrot.lane.b32.xlu0 %v79, 96
    %v1463 = vpop.permute.xlu0 %1462
    %1464 = vrot.lane.b32.xlu0 %v81, 96
    %v1465 = vpop.permute.xlu0 %1464
    %1466 = vrot.lane.b32.xlu0 %v83, 96
    %v1467 = vpop.permute.xlu0 %1466
    %1468 = vrot.lane.b32.xlu0 %v85, 96
    %v1469 = vpop.permute.xlu0 %1468
    %v1475 = vsel %vm94, %v1452, 0
    %v1478 = vsel %vm94, %v1453, 0
    %1480 = vmatprep.subr.mxu0 0.0
    %1481 = vmatpush1.msra.mxu0 0.0
    %1482 = vmatprep.subr.mxu0 0.0
    %1483 = vmatpush1.msra.mxu0 0.0
    %1484 = vmatprep.subr.mxu0 0.0
    %1485 = vmatpush1.msra.mxu0 0.0
    %1486 = vmatprep.subr.mxu0 0.0
    %1487 = vmatpush1.msra.mxu0 0.0
    %1488 = vmatprep.subr.mxu0 0.0
    %1489 = vmatpush1.msra.mxu0 0.0
    %1490 = vmatprep.subr.mxu0 0.0
    %1491 = vmatpush1.msra.mxu0 0.0
    %1492 = vmatprep.subr.mxu0 0.0
    %1493 = vmatpush1.msra.mxu0 0.0
    %1494 = vmatprep.subr.mxu0 0.0
    %1495 = vmatpush1.msra.mxu0 0.0
    %1496 = vmatprep.subr.mxu0 0.0
    %1497 = vmatpush1.msra.mxu0 0.0
    %1498 = vmatprep.subr.mxu0 0.0
    %1499 = vmatpush1.msra.mxu0 0.0
    %1500 = vmatprep.subr.mxu0 0.0
    %1501 = vmatpush1.msra.mxu0 0.0
    %1502 = vmatprep.subr.mxu0 0.0
    %1503 = vmatpush1.msra.mxu0 0.0
    %1504 = vmatprep.subr.mxu0 0.0
    %1505 = vmatpush1.msra.mxu0 %v1469
    %1506 = vmatprep.subr.mxu0 0.0
    %1507 = vmatpush1.msra.mxu0 %v1467
    %1508 = vmatprep.subr.mxu0 0.0
    %1509 = vmatpush1.msra.mxu0 %v1465
    %1510 = vmatprep.subr.mxu0 0.0
    %1511 = vmatpush1.msra.mxu0 %v1463
    %1512 = vmatprep.subr.mxu0 0.0
    %1513 = vmatpush2.msra.mxu0 0.0
    %1514 = vmatprep.subr.mxu0 0.0
    %1515 = vmatpush2.msra.mxu0 0.0
    %1516 = vmatprep.subr.mxu0 0.0
    %1517 = vmatpush2.msra.mxu0 0.0
    %1518 = vmatprep.subr.mxu0 0.0
    %1519 = vmatpush2.msra.mxu0 0.0
    %1520 = vmatprep.subr.mxu0 0.0
    %1521 = vmatpush2.msra.mxu0 0.0
    %1522 = vmatprep.subr.mxu0 0.0
    %1523 = vmatpush2.msra.mxu0 0.0
    %1524 = vmatprep.subr.mxu0 0.0
    %1525 = vmatpush2.msra.mxu0 0.0
    %1526 = vmatprep.subr.mxu0 0.0
    %1527 = vmatpush2.msra.mxu0 0.0
    %1528 = vmatprep.subr.mxu0 0.0
    %1529 = vmatpush2.msra.mxu0 0.0
    %1530 = vmatprep.subr.mxu0 0.0
    %1531 = vmatpush2.msra.mxu0 0.0
    %1532 = vmatprep.subr.mxu0 0.0
    %1533 = vmatpush2.msra.mxu0 0.0
    %1534 = vmatprep.subr.mxu0 0.0
    %1535 = vmatpush2.msra.mxu0 0.0
    %1536 = vmatprep.subr.mxu0 0.0
    %1537 = vmatpush2.msra.mxu0 0.0
    %1538 = vmatprep.subr.mxu0 0.0
    %1539 = vmatpush2.msra.mxu0 0.0
    %1540 = vmatprep.subr.mxu0 0.0
    %1541 = vmatpush2.msra.mxu0 0.0
    %1542 = vmatprep.subr.mxu0 0.0
    %1543 = vmatpush2.msra.mxu0 0.0
    %1544 = vmatprep.mubr.f32.mxu0 0.0
    %1545 = vmatmul.mubr.f32.gmra.mxu0 %v1475
    %v1546 = vpop.f32.mrf.mxu0
    %v1547 = vadd.f32 %v1457, %v1546
    %v1548 = vpop.f32.mrf.mxu0
    %1549 = vmatprep.mubr.f32.mxu0 0.0
    %1550 = vmatmul.mubr.f32.gmra.mxu0 %v1478
    %v1551 = vpop.f32.mrf.mxu0
    %v1552 = vadd.f32 %v1457, %v1551
    %v1553 = vpop.f32.mrf.mxu0
    %1554 = vdwg.mxu0
    %v1555 = vadd.f32 %v1365, %v1547
    %v1556 = vadd.f32 %v1366, %v1552
    %v1557 = vsel %vm94, %v1555, 0.0
    %1558 = vadd.xlane.f32.xlu0 %v1557
    %v1559 = vpop.xlane.xlu0 %1558
    %v1560 = vsel %vm94, %v1556, 0.0
    %1561 = vadd.xlane.f32.xlu0 %v1560
    %v1562 = vpop.xlane.xlu0 %1561
    %v1563 = vmul.f32 %v1559, %v1334
    %v1564 = vmul.f32 %v1562, %v1334
    %v1565 = vsub.f32 %v1555, %v1563
    %v1566 = vsub.f32 %v1556, %v1564
    %v1567 = vmul.f32 %v1565, %v1565
    %v1568 = vmul.f32 %v1566, %v1566
    %v1569 = vsel %vm94, %v1567, 0.0
    %1570 = vadd.xlane.f32.xlu0 %v1569
    %v1571 = vpop.xlane.xlu0 %1570
    %v1572 = vsel %vm94, %v1568, 0.0
    %1573 = vadd.xlane.f32.xlu0 %v1572
    %v1574 = vpop.xlane.xlu0 %1573
    %v1575 = vmul.f32 %v1571, %v1334
    %v1576 = vmul.f32 %v1574, %v1334
    %v1577 = vadd.f32 %v1575, 1e-05
    %v1578 = vadd.f32 %v1576, 1e-05
    %v1579 = vrsqrt.pop %v1577
    %v1580 = vrsqrt.pop %v1578
    %v1581 = vmul.f32 %v1565, %v1579
    %v1582 = vmul.f32 %v1566, %v1580
    %v1583 = vlaneseq
    %v1584 = vshrl.u32 %v1583, 7
    %v1585 = vsub.s32 5, %v1584
    %v1586 = vrot.slane %v86, %v1585
    %v1587 = vmul.f32 %v1581, %v1586
    %v1588 = vmul.f32 %v1582, %v1586
    %v1589 = vlaneseq
    %v1590 = vshrl.u32 %v1589, 7
    %v1591 = vsub.s32 6, %v1590
    %v1592 = vrot.slane %v86, %v1591
    %v1593 = vadd.f32 %v1587, %v1592
    %v1594 = vadd.f32 %v1588, %v1592
    %1595 = vst.msk [vmem:[#allocation10] sm:$0xff] %vm94, %v1593
    %1596 = vst.msk [vmem:[#allocation10 + $0x8] sm:$0xff] %vm94, %v1594
    // Predicated region
    $region38: #{encoder_layer_forward.1} parent=1 // pred_check
      _
    $region39: #{encoder_layer_forward.1} parent=1 // pred_check_branch
      %1598 = sbr.rel (0) target = $region41
    $region40: #{encoder_layer_forward.1} parent=1 // pred_region
      %s1600 = ssub.s32 256, 256
      %1601 = vsyncadd [#allocation4], %s1600
      %s1602 = sshll.u32 [#allocation10], 4
      %s1603 = int_to_ptr.vmem [resolvable:$true] %s1602
      %1608 = dma.vmem_to_hbm [thread:$0]  %s1603, 256, %s5, [#allocation4], 128, 128, 8
    $region41: #{encoder_layer_forward.1} parent=1 // pred_fallthru
      _
    // Predicated region
    $region42: #{encoder_layer_forward.1} parent=1 // pred_check
      _
    $region43: #{encoder_layer_forward.1} parent=1 // pred_check_branch
      %1610 = sbr.rel (0) target = $region45
    $region44: #{encoder_layer_forward.1} parent=1 // pred_region
      %1611 = dma.done [#allocation4], 256
    $region45: #{encoder_layer_forward.1} parent=1 // pred_fallthru
      _
    %1612 = vsyncpa [#allocation3], 1
    %1613 = vsyncpa [#allocation6], 1
    %1614 = vsyncpa [#allocation9], 1
    %1615 = vsyncpa [#allocation4], 1

</llo_original>
